<compile_context>
chip_gen: v5e
topology: v5e:2x2
jax: 0.10.0
libtpu: 0.0.40
codegen_flags: <defaults>
</compile_context>

<pallas_src>
import jax
import jax.numpy as jnp
from jax import lax
from jax.experimental import pallas as pl
from jax.experimental.pallas import tpu as pltpu

C_OUT = 8     # conv output channels
K = 3         # conv kernel size
TILE_N = 128  # batch samples per grid step (one full lane width; keeps the
              # per-row working set < 64 vregs so nothing spills)


def net_kernel(wconv_ref, x_ref, bconv_ref, w1_ref, b1_ref, w2_ref, b2_ref,
               out_ref, pooled_ref):
    # x_ref: [28, 28, TILE_N]  (rows major, cols on sublanes, batch on lanes)
    n_rows = x_ref.shape[0]
    n_cols = x_ref.shape[1]
    oh = n_rows - K + 1              # 26 output rows
    ow = n_cols - K + 1              # 26 output cols

    # ---- conv1 (valid, stride 1) fused row-wise with the global max pool ----
    def row_body(i, chan_max):
        # Three input rows needed for output row i; each [28, TILE_N].
        rows = [x_ref[i + dy] for dy in range(K)]
        # 9 tap views, each [26, TILE_N]; shared across all 8 channels.
        taps = [rows[dy][dx:dx + ow, :] for dy in range(K) for dx in range(K)]
        new_max = []
        for c in range(C_OUT):
            acc = taps[0] * wconv_ref[c * K * K]          # SMEM scalar * vreg
            for t in range(1, K * K):
                acc = acc + taps[t] * wconv_ref[c * K * K + t]
            # max over the 26 output columns (sublane reduce, XLU) -> [1, TILE_N]
            row_max = jnp.max(acc, axis=0, keepdims=True)
            new_max.append(jnp.maximum(chan_max[c], row_max))
        return tuple(new_max)

    init = tuple(jnp.full((1, TILE_N), -jnp.inf, dtype=jnp.float32)
                 for _ in range(C_OUT))
    chan_max = lax.fori_loop(0, oh, row_body, init)

    # Park the per-channel pooled maxima on sublane rows of a tiny scratch.
    for c in range(C_OUT):
        pooled_ref[c:c + 1, :] = chan_max[c]

    # ---- bias (after max is equivalent: max(a + b) == max(a) + b), relu ----
    pooled = jnp.maximum(pooled_ref[...] + bconv_ref[...], 0.0)      # [8, TILE_N]

    # ---- fc1 -> relu -> fc2 on the MXU, channels-first layout ----
    h = jnp.dot(w1_ref[...], pooled, preferred_element_type=jnp.float32)
    h = jnp.maximum(h + b1_ref[...], 0.0)                            # [8, TILE_N]
    logits = jnp.dot(w2_ref[...], h, preferred_element_type=jnp.float32)
    logits = logits + b2_ref[...]                                    # [2, TILE_N]

    # ---- log_softmax over the class axis (sublane axis here) ----
    m = jnp.max(logits, axis=0, keepdims=True)
    s = logits - m
    lse = jnp.log(jnp.sum(jnp.exp(s), axis=0, keepdims=True))
    out_ref[...] = s - lse                                           # [2, TILE_N]


def net_forward(x, params):
    """x: [N, 1, 28, 28] f32 (NCHW).  Returns log-probs [N, 2]."""
    wconv, bconv, w1, b1, w2, b2 = params
    n, cin, hh, ww = x.shape
    assert cin == 1 and hh == 28 and ww == 28, "module hard-codes pool size 26"

    # Batch-on-lanes layout, padded to a multiple of the lane tile.
    n_pad = ((n + TILE_N - 1) // TILE_N) * TILE_N
    xt = jnp.transpose(x[:, 0, :, :], (1, 2, 0))        # [28, 28, N]
    if n_pad != n:
        xt = jnp.pad(xt, ((0, 0), (0, 0), (0, n_pad - n)))

    wconv_flat = wconv.reshape(-1)                      # [8*1*3*3] = [72]
    grid = (n_pad // TILE_N,)

    out_t = pl.pallas_call(
        net_kernel,
        out_shape=jax.ShapeDtypeStruct((2, n_pad), jnp.float32),
        grid=grid,
        in_specs=[
            pl.BlockSpec(memory_space=pltpu.MemorySpace.SMEM),     # conv w [72]
            pl.BlockSpec((28, 28, TILE_N), lambda i: (0, 0, i)),   # x tile
            pl.BlockSpec(memory_space=pltpu.MemorySpace.VMEM),     # conv bias [8,1]
            pl.BlockSpec(memory_space=pltpu.MemorySpace.VMEM),     # w1 [8,8] (out,in)
            pl.BlockSpec(memory_space=pltpu.MemorySpace.VMEM),     # b1 [8,1]
            pl.BlockSpec(memory_space=pltpu.MemorySpace.VMEM),     # w2 [2,8] (out,in)
            pl.BlockSpec(memory_space=pltpu.MemorySpace.VMEM),     # b2 [2,1]
        ],
        out_specs=pl.BlockSpec((2, TILE_N), lambda i: (0, i)),     # lane-dense out
        scratch_shapes=[pltpu.VMEM((C_OUT, TILE_N), jnp.float32)],  # pooled [8,N]
        compiler_params=pltpu.CompilerParams(
            dimension_semantics=("parallel",)),
    )(wconv_flat, xt, bconv.reshape(C_OUT, 1),
      w1, b1.reshape(-1, 1), w2, b2.reshape(-1, 1))

    return out_t[:, :n].T                               # back to [N, 2]


def reference(x, params):
    """Pure-JAX reference reproducing the PyTorch forward pass."""
    wconv, bconv, w1, b1, w2, b2 = params
    y = jax.lax.conv_general_dilated(
        x, wconv, window_strides=(1, 1), padding="VALID",
        dimension_numbers=("NCHW", "OIHW", "NCHW"))
    y = y + bconv[None, :, None, None]
    y = jnp.max(y, axis=(2, 3))          # max_pool2d(26) on 26x26 == global max
    y = jnp.maximum(y, 0.0)
    y = y @ w1.T + b1                    # PyTorch Linear: x @ W.T + b
    y = jnp.maximum(y, 0.0)
    y = y @ w2.T + b2
    return jax.nn.log_softmax(y, axis=1)


if __name__ == "__main__":
    key = jax.random.PRNGKey(0)
    ks = jax.random.split(key, 7)

    # Deterministic synthetic parameters (shapes from Net.__init__, PyTorch layout).
    wconv = 0.1 * jax.random.normal(ks[0], (C_OUT, 1, K, K), jnp.float32)  # OIHW
    bconv = 0.1 * jax.random.normal(ks[1], (C_OUT,), jnp.float32)
    w1 = 0.1 * jax.random.normal(ks[2], (8, 8), jnp.float32)    # [out, in]
    b1 = 0.1 * jax.random.normal(ks[3], (8,), jnp.float32)
    w2 = 0.1 * jax.random.normal(ks[4], (2, 8), jnp.float32)    # [out, in]
    b2 = 0.1 * jax.random.normal(ks[5], (2,), jnp.float32)
    params = (wconv, bconv, w1, b1, w2, b2)

    # Input: batch=2, NCHW, 1x28x28 (spatial fixed by the hard-coded pool of 26).
    x = jax.random.normal(ks[6], (2, 1, 28, 28), jnp.float32)

    out = jax.block_until_ready(net_forward(x, params))
    ref = jax.block_until_ready(reference(x, params))

    assert out.shape == (2, 2)
    assert jnp.allclose(out, ref, atol=1e-4, rtol=1e-4), (out, ref)
    print("KERNEL_OK")
</pallas_src>

<mosaic_0001>
module attributes {stable_mosaic.version = 11 : i64} {
  func.func @net_kernel(%arg0: i32, %arg1: memref<72xf32, #tpu.memory_space<smem>>, %arg2: memref<28x28x128xf32, #tpu.memory_space<vmem>>, %arg3: memref<8x1xf32, #tpu.memory_space<vmem>>, %arg4: memref<8x8xf32, #tpu.memory_space<vmem>>, %arg5: memref<8x1xf32, #tpu.memory_space<vmem>>, %arg6: memref<2x8xf32, #tpu.memory_space<vmem>>, %arg7: memref<2x1xf32, #tpu.memory_space<vmem>>, %arg8: memref<2x128xf32, #tpu.memory_space<vmem>>, %arg9: memref<8x128xf32, #tpu.memory_space<vmem>>) attributes {dimension_semantics = [#tpu.dimension_semantics<parallel>], iteration_bounds = array<i64: 1>, scalar_prefetch = 0 : i64, scratch_operands = 1 : i64, tpu.core_type = #tpu.core_type<tc>, window_params = [{transform_indices = @transform_0, window_bounds = array<i64: 72>}, {transform_indices = @transform_1, window_bounds = array<i64: 28, 28, 128>}, {pipeline_mode = #tpu.pipeline_mode<synchronous>, transform_indices = @transform_2, window_bounds = array<i64: 8, 1>}, {pipeline_mode = #tpu.pipeline_mode<synchronous>, transform_indices = @transform_3, window_bounds = array<i64: 8, 8>}, {pipeline_mode = #tpu.pipeline_mode<synchronous>, transform_indices = @transform_4, window_bounds = array<i64: 8, 1>}, {pipeline_mode = #tpu.pipeline_mode<synchronous>, transform_indices = @transform_5, window_bounds = array<i64: 2, 8>}, {pipeline_mode = #tpu.pipeline_mode<synchronous>, transform_indices = @transform_6, window_bounds = array<i64: 2, 1>}, {transform_indices = @transform_7, window_bounds = array<i64: 2, 128>}]} {
    %cst = arith.constant 0xFF800000 : f32
    %0 = vector.broadcast %cst : f32 to vector<1x128xf32>
    %cst_0 = arith.constant 0xFF800000 : f32
    %1 = vector.broadcast %cst_0 : f32 to vector<1x128xf32>
    %cst_1 = arith.constant 0xFF800000 : f32
    %2 = vector.broadcast %cst_1 : f32 to vector<1x128xf32>
    %cst_2 = arith.constant 0xFF800000 : f32
    %3 = vector.broadcast %cst_2 : f32 to vector<1x128xf32>
    %cst_3 = arith.constant 0xFF800000 : f32
    %4 = vector.broadcast %cst_3 : f32 to vector<1x128xf32>
    %cst_4 = arith.constant 0xFF800000 : f32
    %5 = vector.broadcast %cst_4 : f32 to vector<1x128xf32>
    %cst_5 = arith.constant 0xFF800000 : f32
    %6 = vector.broadcast %cst_5 : f32 to vector<1x128xf32>
    %cst_6 = arith.constant 0xFF800000 : f32
    %7 = vector.broadcast %cst_6 : f32 to vector<1x128xf32>
    %c0_i32 = arith.constant 0 : i32
    %c26_i32 = arith.constant 26 : i32
    %8 = arith.addi %c0_i32, %c26_i32 : i32
    %c1_i32 = arith.constant 1 : i32
    %9:8 = scf.for %arg10 = %c0_i32 to %8 step %c1_i32 iter_args(%arg11 = %0, %arg12 = %1, %arg13 = %2, %arg14 = %3, %arg15 = %4, %arg16 = %5, %arg17 = %6, %arg18 = %7) -> (vector<1x128xf32>, vector<1x128xf32>, vector<1x128xf32>, vector<1x128xf32>, vector<1x128xf32>, vector<1x128xf32>, vector<1x128xf32>, vector<1x128xf32>)  : i32 {
      %c0_i32_36 = arith.constant 0 : i32
      %47 = arith.addi %arg10, %c0_i32_36 : i32
      %48 = arith.index_cast %47 : i32 to index
      %c0_37 = arith.constant 0 : index
      %c0_38 = arith.constant 0 : index
      %49 = vector.load %arg2[%48, %c0_37, %c0_38] : memref<28x28x128xf32, #tpu.memory_space<vmem>>, vector<1x28x128xf32>
      %50 = vector.shape_cast %49 : vector<1x28x128xf32> to vector<28x128xf32>
      %c1_i32_39 = arith.constant 1 : i32
      %51 = arith.addi %arg10, %c1_i32_39 : i32
      %52 = arith.index_cast %51 : i32 to index
      %c0_40 = arith.constant 0 : index
      %c0_41 = arith.constant 0 : index
      %53 = vector.load %arg2[%52, %c0_40, %c0_41] : memref<28x28x128xf32, #tpu.memory_space<vmem>>, vector<1x28x128xf32>
      %54 = vector.shape_cast %53 : vector<1x28x128xf32> to vector<28x128xf32>
      %c2_i32 = arith.constant 2 : i32
      %55 = arith.addi %arg10, %c2_i32 : i32
      %56 = arith.index_cast %55 : i32 to index
      %c0_42 = arith.constant 0 : index
      %c0_43 = arith.constant 0 : index
      %57 = vector.load %arg2[%56, %c0_42, %c0_43] : memref<28x28x128xf32, #tpu.memory_space<vmem>>, vector<1x28x128xf32>
      %58 = vector.shape_cast %57 : vector<1x28x128xf32> to vector<28x128xf32>
      %59 = vector.extract_strided_slice %50 {offsets = [0, 0], sizes = [26, 128], strides = [1, 1]} : vector<28x128xf32> to vector<26x128xf32>
      %60 = vector.extract_strided_slice %50 {offsets = [1, 0], sizes = [26, 128], strides = [1, 1]} : vector<28x128xf32> to vector<26x128xf32>
      %61 = vector.extract_strided_slice %50 {offsets = [2, 0], sizes = [26, 128], strides = [1, 1]} : vector<28x128xf32> to vector<26x128xf32>
      %62 = vector.extract_strided_slice %54 {offsets = [0, 0], sizes = [26, 128], strides = [1, 1]} : vector<28x128xf32> to vector<26x128xf32>
      %63 = vector.extract_strided_slice %54 {offsets = [1, 0], sizes = [26, 128], strides = [1, 1]} : vector<28x128xf32> to vector<26x128xf32>
      %64 = vector.extract_strided_slice %54 {offsets = [2, 0], sizes = [26, 128], strides = [1, 1]} : vector<28x128xf32> to vector<26x128xf32>
      %65 = vector.extract_strided_slice %58 {offsets = [0, 0], sizes = [26, 128], strides = [1, 1]} : vector<28x128xf32> to vector<26x128xf32>
      %66 = vector.extract_strided_slice %58 {offsets = [1, 0], sizes = [26, 128], strides = [1, 1]} : vector<28x128xf32> to vector<26x128xf32>
      %67 = vector.extract_strided_slice %58 {offsets = [2, 0], sizes = [26, 128], strides = [1, 1]} : vector<28x128xf32> to vector<26x128xf32>
      %c0_44 = arith.constant 0 : index
      %68 = memref.load %arg1[%c0_44] : memref<72xf32, #tpu.memory_space<smem>>
      %69 = vector.broadcast %68 : f32 to vector<26x128xf32>
      %70 = arith.mulf %59, %69 : vector<26x128xf32>
      %c1_45 = arith.constant 1 : index
      %71 = memref.load %arg1[%c1_45] : memref<72xf32, #tpu.memory_space<smem>>
      %72 = vector.broadcast %71 : f32 to vector<26x128xf32>
      %73 = arith.mulf %60, %72 : vector<26x128xf32>
      %74 = arith.addf %70, %73 : vector<26x128xf32>
      %c2_46 = arith.constant 2 : index
      %75 = memref.load %arg1[%c2_46] : memref<72xf32, #tpu.memory_space<smem>>
      %76 = vector.broadcast %75 : f32 to vector<26x128xf32>
      %77 = arith.mulf %61, %76 : vector<26x128xf32>
      %78 = arith.addf %74, %77 : vector<26x128xf32>
      %c3_47 = arith.constant 3 : index
      %79 = memref.load %arg1[%c3_47] : memref<72xf32, #tpu.memory_space<smem>>
      %80 = vector.broadcast %79 : f32 to vector<26x128xf32>
      %81 = arith.mulf %62, %80 : vector<26x128xf32>
      %82 = arith.addf %78, %81 : vector<26x128xf32>
      %c4_48 = arith.constant 4 : index
      %83 = memref.load %arg1[%c4_48] : memref<72xf32, #tpu.memory_space<smem>>
      %84 = vector.broadcast %83 : f32 to vector<26x128xf32>
      %85 = arith.mulf %63, %84 : vector<26x128xf32>
      %86 = arith.addf %82, %85 : vector<26x128xf32>
      %c5_49 = arith.constant 5 : index
      %87 = memref.load %arg1[%c5_49] : memref<72xf32, #tpu.memory_space<smem>>
      %88 = vector.broadcast %87 : f32 to vector<26x128xf32>
      %89 = arith.mulf %64, %88 : vector<26x128xf32>
      %90 = arith.addf %86, %89 : vector<26x128xf32>
      %c6_50 = arith.constant 6 : index
      %91 = memref.load %arg1[%c6_50] : memref<72xf32, #tpu.memory_space<smem>>
      %92 = vector.broadcast %91 : f32 to vector<26x128xf32>
      %93 = arith.mulf %65, %92 : vector<26x128xf32>
      %94 = arith.addf %90, %93 : vector<26x128xf32>
      %c7_51 = arith.constant 7 : index
      %95 = memref.load %arg1[%c7_51] : memref<72xf32, #tpu.memory_space<smem>>
      %96 = vector.broadcast %95 : f32 to vector<26x128xf32>
      %97 = arith.mulf %66, %96 : vector<26x128xf32>
      %98 = arith.addf %94, %97 : vector<26x128xf32>
      %c8 = arith.constant 8 : index
      %99 = memref.load %arg1[%c8] : memref<72xf32, #tpu.memory_space<smem>>
      %100 = vector.broadcast %99 : f32 to vector<26x128xf32>
      %101 = arith.mulf %67, %100 : vector<26x128xf32>
      %102 = arith.addf %98, %101 : vector<26x128xf32>
      %cst_52 = arith.constant dense<0xFF800000> : vector<128xf32>
      %103 = vector.multi_reduction <maximumf>, %102, %cst_52 [0] : vector<26x128xf32> to vector<128xf32>
      %104 = vector.shape_cast %103 : vector<128xf32> to vector<1x128xf32>
      %105 = arith.maximumf %arg11, %104 : vector<1x128xf32>
      %c9 = arith.constant 9 : index
      %106 = memref.load %arg1[%c9] : memref<72xf32, #tpu.memory_space<smem>>
      %107 = vector.broadcast %106 : f32 to vector<26x128xf32>
      %108 = arith.mulf %59, %107 : vector<26x128xf32>
      %c10 = arith.constant 10 : index
      %109 = memref.load %arg1[%c10] : memref<72xf32, #tpu.memory_space<smem>>
      %110 = vector.broadcast %109 : f32 to vector<26x128xf32>
      %111 = arith.mulf %60, %110 : vector<26x128xf32>
      %112 = arith.addf %108, %111 : vector<26x128xf32>
      %c11 = arith.constant 11 : index
      %113 = memref.load %arg1[%c11] : memref<72xf32, #tpu.memory_space<smem>>
      %114 = vector.broadcast %113 : f32 to vector<26x128xf32>
      %115 = arith.mulf %61, %114 : vector<26x128xf32>
      %116 = arith.addf %112, %115 : vector<26x128xf32>
      %c12 = arith.constant 12 : index
      %117 = memref.load %arg1[%c12] : memref<72xf32, #tpu.memory_space<smem>>
      %118 = vector.broadcast %117 : f32 to vector<26x128xf32>
      %119 = arith.mulf %62, %118 : vector<26x128xf32>
      %120 = arith.addf %116, %119 : vector<26x128xf32>
      %c13 = arith.constant 13 : index
      %121 = memref.load %arg1[%c13] : memref<72xf32, #tpu.memory_space<smem>>
      %122 = vector.broadcast %121 : f32 to vector<26x128xf32>
      %123 = arith.mulf %63, %122 : vector<26x128xf32>
      %124 = arith.addf %120, %123 : vector<26x128xf32>
      %c14 = arith.constant 14 : index
      %125 = memref.load %arg1[%c14] : memref<72xf32, #tpu.memory_space<smem>>
      %126 = vector.broadcast %125 : f32 to vector<26x128xf32>
      %127 = arith.mulf %64, %126 : vector<26x128xf32>
      %128 = arith.addf %124, %127 : vector<26x128xf32>
      %c15 = arith.constant 15 : index
      %129 = memref.load %arg1[%c15] : memref<72xf32, #tpu.memory_space<smem>>
      %130 = vector.broadcast %129 : f32 to vector<26x128xf32>
      %131 = arith.mulf %65, %130 : vector<26x128xf32>
      %132 = arith.addf %128, %131 : vector<26x128xf32>
      %c16 = arith.constant 16 : index
      %133 = memref.load %arg1[%c16] : memref<72xf32, #tpu.memory_space<smem>>
      %134 = vector.broadcast %133 : f32 to vector<26x128xf32>
      %135 = arith.mulf %66, %134 : vector<26x128xf32>
      %136 = arith.addf %132, %135 : vector<26x128xf32>
      %c17 = arith.constant 17 : index
      %137 = memref.load %arg1[%c17] : memref<72xf32, #tpu.memory_space<smem>>
      %138 = vector.broadcast %137 : f32 to vector<26x128xf32>
      %139 = arith.mulf %67, %138 : vector<26x128xf32>
      %140 = arith.addf %136, %139 : vector<26x128xf32>
      %cst_53 = arith.constant dense<0xFF800000> : vector<128xf32>
      %141 = vector.multi_reduction <maximumf>, %140, %cst_53 [0] : vector<26x128xf32> to vector<128xf32>
      %142 = vector.shape_cast %141 : vector<128xf32> to vector<1x128xf32>
      %143 = arith.maximumf %arg12, %142 : vector<1x128xf32>
      %c18 = arith.constant 18 : index
      %144 = memref.load %arg1[%c18] : memref<72xf32, #tpu.memory_space<smem>>
      %145 = vector.broadcast %144 : f32 to vector<26x128xf32>
      %146 = arith.mulf %59, %145 : vector<26x128xf32>
      %c19 = arith.constant 19 : index
      %147 = memref.load %arg1[%c19] : memref<72xf32, #tpu.memory_space<smem>>
      %148 = vector.broadcast %147 : f32 to vector<26x128xf32>
      %149 = arith.mulf %60, %148 : vector<26x128xf32>
      %150 = arith.addf %146, %149 : vector<26x128xf32>
      %c20 = arith.constant 20 : index
      %151 = memref.load %arg1[%c20] : memref<72xf32, #tpu.memory_space<smem>>
      %152 = vector.broadcast %151 : f32 to vector<26x128xf32>
      %153 = arith.mulf %61, %152 : vector<26x128xf32>
      %154 = arith.addf %150, %153 : vector<26x128xf32>
      %c21 = arith.constant 21 : index
      %155 = memref.load %arg1[%c21] : memref<72xf32, #tpu.memory_space<smem>>
      %156 = vector.broadcast %155 : f32 to vector<26x128xf32>
      %157 = arith.mulf %62, %156 : vector<26x128xf32>
      %158 = arith.addf %154, %157 : vector<26x128xf32>
      %c22 = arith.constant 22 : index
      %159 = memref.load %arg1[%c22] : memref<72xf32, #tpu.memory_space<smem>>
      %160 = vector.broadcast %159 : f32 to vector<26x128xf32>
      %161 = arith.mulf %63, %160 : vector<26x128xf32>
      %162 = arith.addf %158, %161 : vector<26x128xf32>
      %c23 = arith.constant 23 : index
      %163 = memref.load %arg1[%c23] : memref<72xf32, #tpu.memory_space<smem>>
      %164 = vector.broadcast %163 : f32 to vector<26x128xf32>
      %165 = arith.mulf %64, %164 : vector<26x128xf32>
      %166 = arith.addf %162, %165 : vector<26x128xf32>
      %c24 = arith.constant 24 : index
      %167 = memref.load %arg1[%c24] : memref<72xf32, #tpu.memory_space<smem>>
      %168 = vector.broadcast %167 : f32 to vector<26x128xf32>
      %169 = arith.mulf %65, %168 : vector<26x128xf32>
      %170 = arith.addf %166, %169 : vector<26x128xf32>
      %c25 = arith.constant 25 : index
      %171 = memref.load %arg1[%c25] : memref<72xf32, #tpu.memory_space<smem>>
      %172 = vector.broadcast %171 : f32 to vector<26x128xf32>
      %173 = arith.mulf %66, %172 : vector<26x128xf32>
      %174 = arith.addf %170, %173 : vector<26x128xf32>
      %c26 = arith.constant 26 : index
      %175 = memref.load %arg1[%c26] : memref<72xf32, #tpu.memory_space<smem>>
      %176 = vector.broadcast %175 : f32 to vector<26x128xf32>
      %177 = arith.mulf %67, %176 : vector<26x128xf32>
      %178 = arith.addf %174, %177 : vector<26x128xf32>
      %cst_54 = arith.constant dense<0xFF800000> : vector<128xf32>
      %179 = vector.multi_reduction <maximumf>, %178, %cst_54 [0] : vector<26x128xf32> to vector<128xf32>
      %180 = vector.shape_cast %179 : vector<128xf32> to vector<1x128xf32>
      %181 = arith.maximumf %arg13, %180 : vector<1x128xf32>
      %c27 = arith.constant 27 : index
      %182 = memref.load %arg1[%c27] : memref<72xf32, #tpu.memory_space<smem>>
      %183 = vector.broadcast %182 : f32 to vector<26x128xf32>
      %184 = arith.mulf %59, %183 : vector<26x128xf32>
      %c28 = arith.constant 28 : index
      %185 = memref.load %arg1[%c28] : memref<72xf32, #tpu.memory_space<smem>>
      %186 = vector.broadcast %185 : f32 to vector<26x128xf32>
      %187 = arith.mulf %60, %186 : vector<26x128xf32>
      %188 = arith.addf %184, %187 : vector<26x128xf32>
      %c29 = arith.constant 29 : index
      %189 = memref.load %arg1[%c29] : memref<72xf32, #tpu.memory_space<smem>>
      %190 = vector.broadcast %189 : f32 to vector<26x128xf32>
      %191 = arith.mulf %61, %190 : vector<26x128xf32>
      %192 = arith.addf %188, %191 : vector<26x128xf32>
      %c30 = arith.constant 30 : index
      %193 = memref.load %arg1[%c30] : memref<72xf32, #tpu.memory_space<smem>>
      %194 = vector.broadcast %193 : f32 to vector<26x128xf32>
      %195 = arith.mulf %62, %194 : vector<26x128xf32>
      %196 = arith.addf %192, %195 : vector<26x128xf32>
      %c31 = arith.constant 31 : index
      %197 = memref.load %arg1[%c31] : memref<72xf32, #tpu.memory_space<smem>>
      %198 = vector.broadcast %197 : f32 to vector<26x128xf32>
      %199 = arith.mulf %63, %198 : vector<26x128xf32>
      %200 = arith.addf %196, %199 : vector<26x128xf32>
      %c32 = arith.constant 32 : index
      %201 = memref.load %arg1[%c32] : memref<72xf32, #tpu.memory_space<smem>>
      %202 = vector.broadcast %201 : f32 to vector<26x128xf32>
      %203 = arith.mulf %64, %202 : vector<26x128xf32>
      %204 = arith.addf %200, %203 : vector<26x128xf32>
      %c33 = arith.constant 33 : index
      %205 = memref.load %arg1[%c33] : memref<72xf32, #tpu.memory_space<smem>>
      %206 = vector.broadcast %205 : f32 to vector<26x128xf32>
      %207 = arith.mulf %65, %206 : vector<26x128xf32>
      %208 = arith.addf %204, %207 : vector<26x128xf32>
      %c34 = arith.constant 34 : index
      %209 = memref.load %arg1[%c34] : memref<72xf32, #tpu.memory_space<smem>>
      %210 = vector.broadcast %209 : f32 to vector<26x128xf32>
      %211 = arith.mulf %66, %210 : vector<26x128xf32>
      %212 = arith.addf %208, %211 : vector<26x128xf32>
      %c35 = arith.constant 35 : index
      %213 = memref.load %arg1[%c35] : memref<72xf32, #tpu.memory_space<smem>>
      %214 = vector.broadcast %213 : f32 to vector<26x128xf32>
      %215 = arith.mulf %67, %214 : vector<26x128xf32>
      %216 = arith.addf %212, %215 : vector<26x128xf32>
      %cst_55 = arith.constant dense<0xFF800000> : vector<128xf32>
      %217 = vector.multi_reduction <maximumf>, %216, %cst_55 [0] : vector<26x128xf32> to vector<128xf32>
      %218 = vector.shape_cast %217 : vector<128xf32> to vector<1x128xf32>
      %219 = arith.maximumf %arg14, %218 : vector<1x128xf32>
      %c36 = arith.constant 36 : index
      %220 = memref.load %arg1[%c36] : memref<72xf32, #tpu.memory_space<smem>>
      %221 = vector.broadcast %220 : f32 to vector<26x128xf32>
      %222 = arith.mulf %59, %221 : vector<26x128xf32>
      %c37 = arith.constant 37 : index
      %223 = memref.load %arg1[%c37] : memref<72xf32, #tpu.memory_space<smem>>
      %224 = vector.broadcast %223 : f32 to vector<26x128xf32>
      %225 = arith.mulf %60, %224 : vector<26x128xf32>
      %226 = arith.addf %222, %225 : vector<26x128xf32>
      %c38 = arith.constant 38 : index
      %227 = memref.load %arg1[%c38] : memref<72xf32, #tpu.memory_space<smem>>
      %228 = vector.broadcast %227 : f32 to vector<26x128xf32>
      %229 = arith.mulf %61, %228 : vector<26x128xf32>
      %230 = arith.addf %226, %229 : vector<26x128xf32>
      %c39 = arith.constant 39 : index
      %231 = memref.load %arg1[%c39] : memref<72xf32, #tpu.memory_space<smem>>
      %232 = vector.broadcast %231 : f32 to vector<26x128xf32>
      %233 = arith.mulf %62, %232 : vector<26x128xf32>
      %234 = arith.addf %230, %233 : vector<26x128xf32>
      %c40 = arith.constant 40 : index
      %235 = memref.load %arg1[%c40] : memref<72xf32, #tpu.memory_space<smem>>
      %236 = vector.broadcast %235 : f32 to vector<26x128xf32>
      %237 = arith.mulf %63, %236 : vector<26x128xf32>
      %238 = arith.addf %234, %237 : vector<26x128xf32>
      %c41 = arith.constant 41 : index
      %239 = memref.load %arg1[%c41] : memref<72xf32, #tpu.memory_space<smem>>
      %240 = vector.broadcast %239 : f32 to vector<26x128xf32>
      %241 = arith.mulf %64, %240 : vector<26x128xf32>
      %242 = arith.addf %238, %241 : vector<26x128xf32>
      %c42 = arith.constant 42 : index
      %243 = memref.load %arg1[%c42] : memref<72xf32, #tpu.memory_space<smem>>
      %244 = vector.broadcast %243 : f32 to vector<26x128xf32>
      %245 = arith.mulf %65, %244 : vector<26x128xf32>
      %246 = arith.addf %242, %245 : vector<26x128xf32>
      %c43 = arith.constant 43 : index
      %247 = memref.load %arg1[%c43] : memref<72xf32, #tpu.memory_space<smem>>
      %248 = vector.broadcast %247 : f32 to vector<26x128xf32>
      %249 = arith.mulf %66, %248 : vector<26x128xf32>
      %250 = arith.addf %246, %249 : vector<26x128xf32>
      %c44 = arith.constant 44 : index
      %251 = memref.load %arg1[%c44] : memref<72xf32, #tpu.memory_space<smem>>
      %252 = vector.broadcast %251 : f32 to vector<26x128xf32>
      %253 = arith.mulf %67, %252 : vector<26x128xf32>
      %254 = arith.addf %250, %253 : vector<26x128xf32>
      %cst_56 = arith.constant dense<0xFF800000> : vector<128xf32>
      %255 = vector.multi_reduction <maximumf>, %254, %cst_56 [0] : vector<26x128xf32> to vector<128xf32>
      %256 = vector.shape_cast %255 : vector<128xf32> to vector<1x128xf32>
      %257 = arith.maximumf %arg15, %256 : vector<1x128xf32>
      %c45 = arith.constant 45 : index
      %258 = memref.load %arg1[%c45] : memref<72xf32, #tpu.memory_space<smem>>
      %259 = vector.broadcast %258 : f32 to vector<26x128xf32>
      %260 = arith.mulf %59, %259 : vector<26x128xf32>
      %c46 = arith.constant 46 : index
      %261 = memref.load %arg1[%c46] : memref<72xf32, #tpu.memory_space<smem>>
      %262 = vector.broadcast %261 : f32 to vector<26x128xf32>
      %263 = arith.mulf %60, %262 : vector<26x128xf32>
      %264 = arith.addf %260, %263 : vector<26x128xf32>
      %c47 = arith.constant 47 : index
      %265 = memref.load %arg1[%c47] : memref<72xf32, #tpu.memory_space<smem>>
      %266 = vector.broadcast %265 : f32 to vector<26x128xf32>
      %267 = arith.mulf %61, %266 : vector<26x128xf32>
      %268 = arith.addf %264, %267 : vector<26x128xf32>
      %c48 = arith.constant 48 : index
      %269 = memref.load %arg1[%c48] : memref<72xf32, #tpu.memory_space<smem>>
      %270 = vector.broadcast %269 : f32 to vector<26x128xf32>
      %271 = arith.mulf %62, %270 : vector<26x128xf32>
      %272 = arith.addf %268, %271 : vector<26x128xf32>
      %c49 = arith.constant 49 : index
      %273 = memref.load %arg1[%c49] : memref<72xf32, #tpu.memory_space<smem>>
      %274 = vector.broadcast %273 : f32 to vector<26x128xf32>
      %275 = arith.mulf %63, %274 : vector<26x128xf32>
      %276 = arith.addf %272, %275 : vector<26x128xf32>
      %c50 = arith.constant 50 : index
      %277 = memref.load %arg1[%c50] : memref<72xf32, #tpu.memory_space<smem>>
      %278 = vector.broadcast %277 : f32 to vector<26x128xf32>
      %279 = arith.mulf %64, %278 : vector<26x128xf32>
      %280 = arith.addf %276, %279 : vector<26x128xf32>
      %c51 = arith.constant 51 : index
      %281 = memref.load %arg1[%c51] : memref<72xf32, #tpu.memory_space<smem>>
      %282 = vector.broadcast %281 : f32 to vector<26x128xf32>
      %283 = arith.mulf %65, %282 : vector<26x128xf32>
      %284 = arith.addf %280, %283 : vector<26x128xf32>
      %c52 = arith.constant 52 : index
      %285 = memref.load %arg1[%c52] : memref<72xf32, #tpu.memory_space<smem>>
      %286 = vector.broadcast %285 : f32 to vector<26x128xf32>
      %287 = arith.mulf %66, %286 : vector<26x128xf32>
      %288 = arith.addf %284, %287 : vector<26x128xf32>
      %c53 = arith.constant 53 : index
      %289 = memref.load %arg1[%c53] : memref<72xf32, #tpu.memory_space<smem>>
      %290 = vector.broadcast %289 : f32 to vector<26x128xf32>
      %291 = arith.mulf %67, %290 : vector<26x128xf32>
      %292 = arith.addf %288, %291 : vector<26x128xf32>
      %cst_57 = arith.constant dense<0xFF800000> : vector<128xf32>
      %293 = vector.multi_reduction <maximumf>, %292, %cst_57 [0] : vector<26x128xf32> to vector<128xf32>
      %294 = vector.shape_cast %293 : vector<128xf32> to vector<1x128xf32>
      %295 = arith.maximumf %arg16, %294 : vector<1x128xf32>
      %c54 = arith.constant 54 : index
      %296 = memref.load %arg1[%c54] : memref<72xf32, #tpu.memory_space<smem>>
      %297 = vector.broadcast %296 : f32 to vector<26x128xf32>
      %298 = arith.mulf %59, %297 : vector<26x128xf32>
      %c55 = arith.constant 55 : index
      %299 = memref.load %arg1[%c55] : memref<72xf32, #tpu.memory_space<smem>>
      %300 = vector.broadcast %299 : f32 to vector<26x128xf32>
      %301 = arith.mulf %60, %300 : vector<26x128xf32>
      %302 = arith.addf %298, %301 : vector<26x128xf32>
      %c56 = arith.constant 56 : index
      %303 = memref.load %arg1[%c56] : memref<72xf32, #tpu.memory_space<smem>>
      %304 = vector.broadcast %303 : f32 to vector<26x128xf32>
      %305 = arith.mulf %61, %304 : vector<26x128xf32>
      %306 = arith.addf %302, %305 : vector<26x128xf32>
      %c57 = arith.constant 57 : index
      %307 = memref.load %arg1[%c57] : memref<72xf32, #tpu.memory_space<smem>>
      %308 = vector.broadcast %307 : f32 to vector<26x128xf32>
      %309 = arith.mulf %62, %308 : vector<26x128xf32>
      %310 = arith.addf %306, %309 : vector<26x128xf32>
      %c58 = arith.constant 58 : index
      %311 = memref.load %arg1[%c58] : memref<72xf32, #tpu.memory_space<smem>>
      %312 = vector.broadcast %311 : f32 to vector<26x128xf32>
      %313 = arith.mulf %63, %312 : vector<26x128xf32>
      %314 = arith.addf %310, %313 : vector<26x128xf32>
      %c59 = arith.constant 59 : index
      %315 = memref.load %arg1[%c59] : memref<72xf32, #tpu.memory_space<smem>>
      %316 = vector.broadcast %315 : f32 to vector<26x128xf32>
      %317 = arith.mulf %64, %316 : vector<26x128xf32>
      %318 = arith.addf %314, %317 : vector<26x128xf32>
      %c60 = arith.constant 60 : index
      %319 = memref.load %arg1[%c60] : memref<72xf32, #tpu.memory_space<smem>>
      %320 = vector.broadcast %319 : f32 to vector<26x128xf32>
      %321 = arith.mulf %65, %320 : vector<26x128xf32>
      %322 = arith.addf %318, %321 : vector<26x128xf32>
      %c61 = arith.constant 61 : index
      %323 = memref.load %arg1[%c61] : memref<72xf32, #tpu.memory_space<smem>>
      %324 = vector.broadcast %323 : f32 to vector<26x128xf32>
      %325 = arith.mulf %66, %324 : vector<26x128xf32>
      %326 = arith.addf %322, %325 : vector<26x128xf32>
      %c62 = arith.constant 62 : index
      %327 = memref.load %arg1[%c62] : memref<72xf32, #tpu.memory_space<smem>>
      %328 = vector.broadcast %327 : f32 to vector<26x128xf32>
      %329 = arith.mulf %67, %328 : vector<26x128xf32>
      %330 = arith.addf %326, %329 : vector<26x128xf32>
      %cst_58 = arith.constant dense<0xFF800000> : vector<128xf32>
      %331 = vector.multi_reduction <maximumf>, %330, %cst_58 [0] : vector<26x128xf32> to vector<128xf32>
      %332 = vector.shape_cast %331 : vector<128xf32> to vector<1x128xf32>
      %333 = arith.maximumf %arg17, %332 : vector<1x128xf32>
      %c63 = arith.constant 63 : index
      %334 = memref.load %arg1[%c63] : memref<72xf32, #tpu.memory_space<smem>>
      %335 = vector.broadcast %334 : f32 to vector<26x128xf32>
      %336 = arith.mulf %59, %335 : vector<26x128xf32>
      %c64 = arith.constant 64 : index
      %337 = memref.load %arg1[%c64] : memref<72xf32, #tpu.memory_space<smem>>
      %338 = vector.broadcast %337 : f32 to vector<26x128xf32>
      %339 = arith.mulf %60, %338 : vector<26x128xf32>
      %340 = arith.addf %336, %339 : vector<26x128xf32>
      %c65 = arith.constant 65 : index
      %341 = memref.load %arg1[%c65] : memref<72xf32, #tpu.memory_space<smem>>
      %342 = vector.broadcast %341 : f32 to vector<26x128xf32>
      %343 = arith.mulf %61, %342 : vector<26x128xf32>
      %344 = arith.addf %340, %343 : vector<26x128xf32>
      %c66 = arith.constant 66 : index
      %345 = memref.load %arg1[%c66] : memref<72xf32, #tpu.memory_space<smem>>
      %346 = vector.broadcast %345 : f32 to vector<26x128xf32>
      %347 = arith.mulf %62, %346 : vector<26x128xf32>
      %348 = arith.addf %344, %347 : vector<26x128xf32>
      %c67 = arith.constant 67 : index
      %349 = memref.load %arg1[%c67] : memref<72xf32, #tpu.memory_space<smem>>
      %350 = vector.broadcast %349 : f32 to vector<26x128xf32>
      %351 = arith.mulf %63, %350 : vector<26x128xf32>
      %352 = arith.addf %348, %351 : vector<26x128xf32>
      %c68 = arith.constant 68 : index
      %353 = memref.load %arg1[%c68] : memref<72xf32, #tpu.memory_space<smem>>
      %354 = vector.broadcast %353 : f32 to vector<26x128xf32>
      %355 = arith.mulf %64, %354 : vector<26x128xf32>
      %356 = arith.addf %352, %355 : vector<26x128xf32>
      %c69 = arith.constant 69 : index
      %357 = memref.load %arg1[%c69] : memref<72xf32, #tpu.memory_space<smem>>
      %358 = vector.broadcast %357 : f32 to vector<26x128xf32>
      %359 = arith.mulf %65, %358 : vector<26x128xf32>
      %360 = arith.addf %356, %359 : vector<26x128xf32>
      %c70 = arith.constant 70 : index
      %361 = memref.load %arg1[%c70] : memref<72xf32, #tpu.memory_space<smem>>
      %362 = vector.broadcast %361 : f32 to vector<26x128xf32>
      %363 = arith.mulf %66, %362 : vector<26x128xf32>
      %364 = arith.addf %360, %363 : vector<26x128xf32>
      %c71 = arith.constant 71 : index
      %365 = memref.load %arg1[%c71] : memref<72xf32, #tpu.memory_space<smem>>
      %366 = vector.broadcast %365 : f32 to vector<26x128xf32>
      %367 = arith.mulf %67, %366 : vector<26x128xf32>
      %368 = arith.addf %364, %367 : vector<26x128xf32>
      %cst_59 = arith.constant dense<0xFF800000> : vector<128xf32>
      %369 = vector.multi_reduction <maximumf>, %368, %cst_59 [0] : vector<26x128xf32> to vector<128xf32>
      %370 = vector.shape_cast %369 : vector<128xf32> to vector<1x128xf32>
      %371 = arith.maximumf %arg18, %370 : vector<1x128xf32>
      scf.yield %105, %143, %181, %219, %257, %295, %333, %371 : vector<1x128xf32>, vector<1x128xf32>, vector<1x128xf32>, vector<1x128xf32>, vector<1x128xf32>, vector<1x128xf32>, vector<1x128xf32>, vector<1x128xf32>
    }
    %c26_i32_7 = arith.constant 26 : i32
    %c0 = arith.constant 0 : index
    %c0_8 = arith.constant 0 : index
    %10 = vector.load %arg9[%c0, %c0_8] : memref<8x128xf32, #tpu.memory_space<vmem>>, vector<1x128xf32>
    tpu.vector_store %arg9[%c0, %c0_8], %9#0 {strides = array<i32>} : memref<8x128xf32, #tpu.memory_space<vmem>>, vector<1x128xf32>,
    %c1 = arith.constant 1 : index
    %c0_9 = arith.constant 0 : index
    %11 = vector.load %arg9[%c1, %c0_9] : memref<8x128xf32, #tpu.memory_space<vmem>>, vector<1x128xf32>
    tpu.vector_store %arg9[%c1, %c0_9], %9#1 {strides = array<i32>} : memref<8x128xf32, #tpu.memory_space<vmem>>, vector<1x128xf32>,
    %c2 = arith.constant 2 : index
    %c0_10 = arith.constant 0 : index
    %12 = vector.load %arg9[%c2, %c0_10] : memref<8x128xf32, #tpu.memory_space<vmem>>, vector<1x128xf32>
    tpu.vector_store %arg9[%c2, %c0_10], %9#2 {strides = array<i32>} : memref<8x128xf32, #tpu.memory_space<vmem>>, vector<1x128xf32>,
    %c3 = arith.constant 3 : index
    %c0_11 = arith.constant 0 : index
    %13 = vector.load %arg9[%c3, %c0_11] : memref<8x128xf32, #tpu.memory_space<vmem>>, vector<1x128xf32>
    tpu.vector_store %arg9[%c3, %c0_11], %9#3 {strides = array<i32>} : memref<8x128xf32, #tpu.memory_space<vmem>>, vector<1x128xf32>,
    %c4 = arith.constant 4 : index
    %c0_12 = arith.constant 0 : index
    %14 = vector.load %arg9[%c4, %c0_12] : memref<8x128xf32, #tpu.memory_space<vmem>>, vector<1x128xf32>
    tpu.vector_store %arg9[%c4, %c0_12], %9#4 {strides = array<i32>} : memref<8x128xf32, #tpu.memory_space<vmem>>, vector<1x128xf32>,
    %c5 = arith.constant 5 : index
    %c0_13 = arith.constant 0 : index
    %15 = vector.load %arg9[%c5, %c0_13] : memref<8x128xf32, #tpu.memory_space<vmem>>, vector<1x128xf32>
    tpu.vector_store %arg9[%c5, %c0_13], %9#5 {strides = array<i32>} : memref<8x128xf32, #tpu.memory_space<vmem>>, vector<1x128xf32>,
    %c6 = arith.constant 6 : index
    %c0_14 = arith.constant 0 : index
    %16 = vector.load %arg9[%c6, %c0_14] : memref<8x128xf32, #tpu.memory_space<vmem>>, vector<1x128xf32>
    tpu.vector_store %arg9[%c6, %c0_14], %9#6 {strides = array<i32>} : memref<8x128xf32, #tpu.memory_space<vmem>>, vector<1x128xf32>,
    %c7 = arith.constant 7 : index
    %c0_15 = arith.constant 0 : index
    %17 = vector.load %arg9[%c7, %c0_15] : memref<8x128xf32, #tpu.memory_space<vmem>>, vector<1x128xf32>
    tpu.vector_store %arg9[%c7, %c0_15], %9#7 {strides = array<i32>} : memref<8x128xf32, #tpu.memory_space<vmem>>, vector<1x128xf32>,
    %c0_16 = arith.constant 0 : index
    %c0_17 = arith.constant 0 : index
    %18 = vector.load %arg9[%c0_16, %c0_17] : memref<8x128xf32, #tpu.memory_space<vmem>>, vector<8x128xf32>
    %c0_18 = arith.constant 0 : index
    %c0_19 = arith.constant 0 : index
    %19 = vector.load %arg3[%c0_18, %c0_19] : memref<8x1xf32, #tpu.memory_space<vmem>>, vector<8x1xf32>
    %20 = vector.broadcast %19 : vector<8x1xf32> to vector<8x128xf32>
    %21 = arith.addf %18, %20 : vector<8x128xf32>
    %cst_20 = arith.constant 0.000000e+00 : f32
    %22 = vector.broadcast %cst_20 : f32 to vector<8x128xf32>
    %23 = arith.maximumf %21, %22 : vector<8x128xf32>
    %c0_21 = arith.constant 0 : index
    %c0_22 = arith.constant 0 : index
    %24 = vector.load %arg4[%c0_21, %c0_22] : memref<8x8xf32, #tpu.memory_space<vmem>>, vector<8x8xf32>
    %cst_23 = arith.constant dense<0.000000e+00> : vector<8x128xf32>
    %25 = tpu.matmul %24, %23, %cst_23 {dimension_numbers = #tpu.dot_dimension_numbers<[1], [0], [0], [1], [0, 0, 1, 1], [], []>} : vector<8x8xf32>, vector<8x128xf32>, vector<8x128xf32> -> vector<8x128xf32>
    %c0_24 = arith.constant 0 : index
    %c0_25 = arith.constant 0 : index
    %26 = vector.load %arg5[%c0_24, %c0_25] : memref<8x1xf32, #tpu.memory_space<vmem>>, vector<8x1xf32>
    %27 = vector.broadcast %26 : vector<8x1xf32> to vector<8x128xf32>
    %28 = arith.addf %25, %27 : vector<8x128xf32>
    %cst_26 = arith.constant 0.000000e+00 : f32
    %29 = vector.broadcast %cst_26 : f32 to vector<8x128xf32>
    %30 = arith.maximumf %28, %29 : vector<8x128xf32>
    %c0_27 = arith.constant 0 : index
    %c0_28 = arith.constant 0 : index
    %31 = vector.load %arg6[%c0_27, %c0_28] : memref<2x8xf32, #tpu.memory_space<vmem>>, vector<2x8xf32>
    %cst_29 = arith.constant dense<0.000000e+00> : vector<2x128xf32>
    %32 = tpu.matmul %31, %30, %cst_29 {dimension_numbers = #tpu.dot_dimension_numbers<[1], [0], [0], [1], [0, 0, 1, 1], [], []>} : vector<2x8xf32>, vector<8x128xf32>, vector<2x128xf32> -> vector<2x128xf32>
    %c0_30 = arith.constant 0 : index
    %c0_31 = arith.constant 0 : index
    %33 = vector.load %arg7[%c0_30, %c0_31] : memref<2x1xf32, #tpu.memory_space<vmem>>, vector<2x1xf32>
    %34 = vector.broadcast %33 : vector<2x1xf32> to vector<2x128xf32>
    %35 = arith.addf %32, %34 : vector<2x128xf32>
    %cst_32 = arith.constant dense<0xFF800000> : vector<128xf32>
    %36 = vector.multi_reduction <maximumf>, %35, %cst_32 [0] : vector<2x128xf32> to vector<128xf32>
    %37 = vector.shape_cast %36 : vector<128xf32> to vector<1x128xf32>
    %38 = vector.broadcast %37 : vector<1x128xf32> to vector<2x128xf32>
    %39 = arith.subf %35, %38 : vector<2x128xf32>
    %40 = math.exp %39 : vector<2x128xf32>
    %cst_33 = arith.constant dense<0.000000e+00> : vector<128xf32>
    %41 = vector.multi_reduction <add>, %40, %cst_33 [0] : vector<2x128xf32> to vector<128xf32>
    %42 = vector.shape_cast %41 : vector<128xf32> to vector<1x128xf32>
    %43 = math.log %42 : vector<1x128xf32>
    %44 = vector.broadcast %43 : vector<1x128xf32> to vector<2x128xf32>
    %45 = arith.subf %39, %44 : vector<2x128xf32>
    %c0_34 = arith.constant 0 : index
    %c0_35 = arith.constant 0 : index
    %46 = vector.load %arg8[%c0_34, %c0_35] : memref<2x128xf32, #tpu.memory_space<vmem>>, vector<2x128xf32>
    tpu.vector_store %arg8[%c0_34, %c0_35], %45 {strides = array<i32>} : memref<2x128xf32, #tpu.memory_space<vmem>>, vector<2x128xf32>,
    return
  }
  func.func @transform_0(%arg0: i32) -> i32 {
    %c0_i32 = arith.constant 0 : i32
    %c0_i32_0 = arith.constant 0 : i32
    return %c0_i32 : i32
  }
  func.func @transform_1(%arg0: i32) -> (i32, i32, i32) {
    %c0_i32 = arith.constant 0 : i32
    %c0_i32_0 = arith.constant 0 : i32
    %c0_i32_1 = arith.constant 0 : i32
    return %c0_i32, %c0_i32_0, %arg0 : i32, i32, i32
  }
  func.func @transform_2(%arg0: i32) -> (i32, i32) {
    %c0_i32 = arith.constant 0 : i32
    %c0_i32_0 = arith.constant 0 : i32
    %c0_i32_1 = arith.constant 0 : i32
    return %c0_i32, %c0_i32_0 : i32, i32
  }
  func.func @transform_3(%arg0: i32) -> (i32, i32) {
    %c0_i32 = arith.constant 0 : i32
    %c0_i32_0 = arith.constant 0 : i32
    %c0_i32_1 = arith.constant 0 : i32
    return %c0_i32, %c0_i32_0 : i32, i32
  }
  func.func @transform_4(%arg0: i32) -> (i32, i32) {
    %c0_i32 = arith.constant 0 : i32
    %c0_i32_0 = arith.constant 0 : i32
    %c0_i32_1 = arith.constant 0 : i32
    return %c0_i32, %c0_i32_0 : i32, i32
  }
  func.func @transform_5(%arg0: i32) -> (i32, i32) {
    %c0_i32 = arith.constant 0 : i32
    %c0_i32_0 = arith.constant 0 : i32
    %c0_i32_1 = arith.constant 0 : i32
    return %c0_i32, %c0_i32_0 : i32, i32
  }
  func.func @transform_6(%arg0: i32) -> (i32, i32) {
    %c0_i32 = arith.constant 0 : i32
    %c0_i32_0 = arith.constant 0 : i32
    %c0_i32_1 = arith.constant 0 : i32
    return %c0_i32, %c0_i32_0 : i32, i32
  }
  func.func @transform_7(%arg0: i32) -> (i32, i32) {
    %c0_i32 = arith.constant 0 : i32
    %c0_i32_0 = arith.constant 0 : i32
    return %c0_i32, %arg0 : i32, i32
  }
}

</mosaic_0001>

<llo_original>
// kernel: tpu_custom_call.1
$region0: #{tpu_custom_call.1}
  #allocation0 [shape = 'u32[]', space=smem, size = 0x4, offset = 0x4, fixed_abs, tag = 'smem constant byte address 0x4 - core index']
  #allocation1 [shape = 'u32[72,128]{1,0:T(1,128)}', space=vmem, size = 0x9000, scoped, tag = 'internal scratch']
  #allocation2 [shape = 'f32[8,128]{1,0:T(8,128)}', space=vmem, size = 0x1000, scoped, tag = 'scratch operand']
  %s0 = inlined_call_operand.vmem [shape: f32[72], index: 0, kind: input, shape index: {}]
  %s1 = inlined_call_operand.hbm [shape: f32[28,28,128], index: 1, kind: input, shape index: {}]
  %s2 = inlined_call_operand.vmem [shape: f32[8,1], index: 2, kind: input, shape index: {}]
  %s3 = inlined_call_operand.vmem [shape: f32[8,8], index: 3, kind: input, shape index: {}]
  %s4 = inlined_call_operand.vmem [shape: f32[8,1], index: 4, kind: input, shape index: {}]
  %s5 = inlined_call_operand.vmem [shape: f32[2,8], index: 5, kind: input, shape index: {}]
  %s6 = inlined_call_operand.vmem [shape: f32[2,1], index: 6, kind: input, shape index: {}]
  %s7 = inlined_call_operand.hbm [shape: f32[2,128], index: 7, kind: output, shape index: {}]
  %s8 = sld [smem:[#allocation0]]
  $region53: #{tpu_custom_call.1} parent=0
    _
  %s10 = ssub.s32 1, %s8
  %s11 = scalar_select 0, %s10, %s8
  $region1: #{tpu_custom_call.1} parent=0
    #allocation3 [shape = 'u8[512]{0}', space=smem, size = 0x200, scoped, tag = 'input window, operand 0, single buffered']
    #allocation4 [shape = 's32[1]{0}', space=sflag, size = 0x4, scoped, tag = 'scoped memory for tpu_custom_call.1']
    #allocation5 [shape = 's32[1]{0}', space=sflag, size = 0x4, scoped, tag = 'scoped memory for tpu_custom_call.1']
    #allocation6 [shape = 's32[1]{0}', space=sflag, size = 0x4, scoped, tag = 'scoped memory for tpu_custom_call.1']
    #allocation7 [shape = 'u8[458752]{0}', space=vmem, size = 0x70000, scoped, tag = 'input window, operand 1, single buffered']
    #allocation8 [shape = 'u8[1024]{0}', space=vmem, size = 0x400, scoped, tag = 'output window, operand 0, single buffered']
    %12 = vsyncpa [#allocation6], 0
    %13 = vsyncpa [#allocation4], 0
    %14 = vsyncpa [#allocation5], 0
    // Predicated region
    $region2: #{tpu_custom_call.1} parent=1 // pred_check
      _
    $region3: #{tpu_custom_call.1} parent=1 // pred_check_branch
      %16 = sbr.rel (0) target = $region5
    $region4: #{tpu_custom_call.1} parent=1 // pred_region
      %18 = vsyncadd [#allocation6], 0
      %s20 = sshll.u32 %s0, 4
      %s21 = int_to_ptr.vmem [resolvable:$true] %s20
      %23 = dma.vmem_to_smem %s21, 16, [#allocation3], [#allocation6]
    $region5: #{tpu_custom_call.1} parent=1 // pred_fallthru
      _
    // Predicated region
    $region6: #{tpu_custom_call.1} parent=1 // pred_check
      _
    $region7: #{tpu_custom_call.1} parent=1 // pred_check_branch
      %25 = sbr.rel (0) target = $region9
    $region8: #{tpu_custom_call.1} parent=1 // pred_region
      %27 = vsyncadd [#allocation4], 0
      %s28 = sshll.u32 %s1, 4
      %s29 = int_to_ptr.hbm [resolvable:$true] %s28
      %s30 = sshll.u32 [#allocation7], 4
      %s31 = int_to_ptr.vmem [resolvable:$true] %s30
      %36 = dma.hbm_to_vmem [thread:$0]  %s29, 14336, %s31, [#allocation4], 128, 128, 8
    $region9: #{tpu_custom_call.1} parent=1 // pred_fallthru
      _
    // Predicated region
    $region10: #{tpu_custom_call.1} parent=1 // pred_check
      _
    $region11: #{tpu_custom_call.1} parent=1 // pred_check_branch
      %38 = sbr.rel (0) target = $region13
    $region12: #{tpu_custom_call.1} parent=1 // pred_region
      _
    $region13: #{tpu_custom_call.1} parent=1 // pred_fallthru
      _
    // Predicated region
    $region14: #{tpu_custom_call.1} parent=1 // pred_check
      _
    $region15: #{tpu_custom_call.1} parent=1 // pred_check_branch
      %40 = sbr.rel (0) target = $region17
    $region16: #{tpu_custom_call.1} parent=1 // pred_region
      _
    $region17: #{tpu_custom_call.1} parent=1 // pred_fallthru
      _
    // Predicated region
    $region18: #{tpu_custom_call.1} parent=1 // pred_check
      _
    $region19: #{tpu_custom_call.1} parent=1 // pred_check_branch
      %42 = sbr.rel (0) target = $region21
    $region20: #{tpu_custom_call.1} parent=1 // pred_region
      _
    $region21: #{tpu_custom_call.1} parent=1 // pred_fallthru
      _
    // Predicated region
    $region22: #{tpu_custom_call.1} parent=1 // pred_check
      _
    $region23: #{tpu_custom_call.1} parent=1 // pred_check_branch
      %44 = sbr.rel (0) target = $region25
    $region24: #{tpu_custom_call.1} parent=1 // pred_region
      _
    $region25: #{tpu_custom_call.1} parent=1 // pred_fallthru
      _
    // Predicated region
    $region26: #{tpu_custom_call.1} parent=1 // pred_check
      _
    $region27: #{tpu_custom_call.1} parent=1 // pred_check_branch
      %46 = sbr.rel (0) target = $region29
    $region28: #{tpu_custom_call.1} parent=1 // pred_region
      _
    $region29: #{tpu_custom_call.1} parent=1 // pred_fallthru
      _
    // Predicated region
    $region30: #{tpu_custom_call.1} parent=1 // pred_check
      _
    $region31: #{tpu_custom_call.1} parent=1 // pred_check_branch
      %48 = sbr.rel (0) target = $region33
    $region32: #{tpu_custom_call.1} parent=1 // pred_region
      %50 = dma.done [#allocation6], 16
    $region33: #{tpu_custom_call.1} parent=1 // pred_fallthru
      _
    // Predicated region
    $region34: #{tpu_custom_call.1} parent=1 // pred_check
      _
    $region35: #{tpu_custom_call.1} parent=1 // pred_check_branch
      %52 = sbr.rel (0) target = $region37
    $region36: #{tpu_custom_call.1} parent=1 // pred_region
      %54 = dma.done [#allocation4], 14336
    $region37: #{tpu_custom_call.1} parent=1 // pred_fallthru
      _
    %55 = sfence
    loop: start=0, step=1, limit=26
    $region38: #{tpu_custom_call.1} parent=1 // loop_pre_header
      _
    $region39: #{tpu_custom_call.1} parent=1 // loop_header
      %s57 = sphi 0, %s61
      %p58 = scmp.ge.s32.totalorder %s57, 26
      %v62 = vphi -inf, %v279
      %v63 = vphi -inf, %v466
      %v64 = vphi -inf, %v653
      %v65 = vphi -inf, %v840
      %v66 = vphi -inf, %v1027
      %v67 = vphi -inf, %v1214
      %v68 = vphi -inf, %v1401
      %v69 = vphi -inf, %v1588
    $region40: #{tpu_custom_call.1} parent=1 // loop_header_branch
      %60 = sbr.rel (%p58) target = $region44
    $region41: #{tpu_custom_call.1} parent=1 // loop_body
      %s70 = smul.u32 %s57, 32
      %s71 = scalar_lea.vmem [#allocation7], %s70
      %v72 = vld [vmem:[%s71] sm:$0xff]
      %v73 = vld [vmem:[%s71 + $0x8] sm:$0xff]
      %v74 = vld [vmem:[%s71 + $0x10] sm:$0xff]
      %v75 = vld [vmem:[%s71 + $0x18] sm:$0xf]
      %s76 = sadd.s32 %s57, 1
      %s77 = smul.u32 %s76, 32
      %s78 = scalar_lea.vmem [#allocation7], %s77
      %v79 = vld [vmem:[%s78] sm:$0xff]
      %v80 = vld [vmem:[%s78 + $0x8] sm:$0xff]
      %v81 = vld [vmem:[%s78 + $0x10] sm:$0xff]
      %v82 = vld [vmem:[%s78 + $0x18] sm:$0xf]
      %s83 = sadd.s32 %s57, 2
      %s84 = smul.u32 %s83, 32
      %s85 = scalar_lea.vmem [#allocation7], %s84
      %v86 = vld [vmem:[%s85] sm:$0xff]
      %v87 = vld [vmem:[%s85 + $0x8] sm:$0xff]
      %v88 = vld [vmem:[%s85 + $0x10] sm:$0xff]
      %v89 = vld [vmem:[%s85 + $0x18] sm:$0xf]
      %s90 = sld [smem:[#allocation3]]
      %v91 = vstv %s90
      %v92 = vmul.f32 %v72, %v91
      %v93 = vmul.f32 %v73, %v91
      %v94 = vmul.f32 %v74, %v91
      %v95 = vmul.f32 %v75, %v91
      %s96 = sld [smem:[#allocation3 + $0x1]]
      %v97 = vstv %s96
      %v98 = vmul.f32 %v72, %v97
      %v99 = vmul.f32 %v73, %v97
      %v100 = vmul.f32 %v74, %v97
      %v101 = vmul.f32 %v75, %v97
      %vm106 = vcmask 1046528
      %v107 = vrot.slane %v98, 1
      %v108 = vrot.slane %v99, 1
      %v109 = vsel %vm106, %v107, %v108
      %v110 = vrot.slane %v100, 1
      %v111 = vsel %vm106, %v108, %v110
      %v112 = vrot.slane %v101, 1
      %v113 = vsel %vm106, %v110, %v112
      %v118 = vadd.f32 %v92, %v109
      %v119 = vadd.f32 %v93, %v111
      %v120 = vadd.f32 %v94, %v113
      %v121 = vadd.f32 %v95, %v112
      %s122 = sld [smem:[#allocation3 + $0x2]]
      %v123 = vstv %s122
      %v124 = vmul.f32 %v72, %v123
      %v125 = vmul.f32 %v73, %v123
      %v126 = vmul.f32 %v74, %v123
      %v127 = vmul.f32 %v75, %v123
      %vm132 = vcmask 1045504
      %v133 = vrot.slane %v124, 2
      %v134 = vrot.slane %v125, 2
      %v135 = vsel %vm132, %v133, %v134
      %v136 = vrot.slane %v126, 2
      %v137 = vsel %vm132, %v134, %v136
      %v138 = vrot.slane %v127, 2
      %v139 = vsel %vm132, %v136, %v138
      %v144 = vadd.f32 %v118, %v135
      %v145 = vadd.f32 %v119, %v137
      %v146 = vadd.f32 %v120, %v139
      %v147 = vadd.f32 %v121, %v138
      %s148 = sld [smem:[#allocation3 + $0x3]]
      %v149 = vstv %s148
      %v150 = vmul.f32 %v79, %v149
      %v151 = vmul.f32 %v80, %v149
      %v152 = vmul.f32 %v81, %v149
      %v153 = vmul.f32 %v82, %v149
      %v154 = vadd.f32 %v144, %v150
      %v155 = vadd.f32 %v145, %v151
      %v156 = vadd.f32 %v146, %v152
      %v157 = vadd.f32 %v147, %v153
      %s158 = sld [smem:[#allocation3 + $0x4]]
      %v159 = vstv %s158
      %v160 = vmul.f32 %v79, %v159
      %v161 = vmul.f32 %v80, %v159
      %v162 = vmul.f32 %v81, %v159
      %v163 = vmul.f32 %v82, %v159
      %v168 = vrot.slane %v160, 1
      %v169 = vrot.slane %v161, 1
      %v170 = vsel %vm106, %v168, %v169
      %v171 = vrot.slane %v162, 1
      %v172 = vsel %vm106, %v169, %v171
      %v173 = vrot.slane %v163, 1
      %v174 = vsel %vm106, %v171, %v173
      %v179 = vadd.f32 %v154, %v170
      %v180 = vadd.f32 %v155, %v172
      %v181 = vadd.f32 %v156, %v174
      %v182 = vadd.f32 %v157, %v173
      %s183 = sld [smem:[#allocation3 + $0x5]]
      %v184 = vstv %s183
      %v185 = vmul.f32 %v79, %v184
      %v186 = vmul.f32 %v80, %v184
      %v187 = vmul.f32 %v81, %v184
      %v188 = vmul.f32 %v82, %v184
      %v193 = vrot.slane %v185, 2
      %v194 = vrot.slane %v186, 2
      %v195 = vsel %vm132, %v193, %v194
      %v196 = vrot.slane %v187, 2
      %v197 = vsel %vm132, %v194, %v196
      %v198 = vrot.slane %v188, 2
      %v199 = vsel %vm132, %v196, %v198
      %v204 = vadd.f32 %v179, %v195
      %v205 = vadd.f32 %v180, %v197
      %v206 = vadd.f32 %v181, %v199
      %v207 = vadd.f32 %v182, %v198
      %s208 = sld [smem:[#allocation3 + $0x6]]
      %v209 = vstv %s208
      %v210 = vmul.f32 %v86, %v209
      %v211 = vmul.f32 %v87, %v209
      %v212 = vmul.f32 %v88, %v209
      %v213 = vmul.f32 %v89, %v209
      %v214 = vadd.f32 %v204, %v210
      %v215 = vadd.f32 %v205, %v211
      %v216 = vadd.f32 %v206, %v212
      %v217 = vadd.f32 %v207, %v213
      %s218 = sld [smem:[#allocation3 + $0x7]]
      %v219 = vstv %s218
      %v220 = vmul.f32 %v86, %v219
      %v221 = vmul.f32 %v87, %v219
      %v222 = vmul.f32 %v88, %v219
      %v223 = vmul.f32 %v89, %v219
      %v228 = vrot.slane %v220, 1
      %v229 = vrot.slane %v221, 1
      %v230 = vsel %vm106, %v228, %v229
      %v231 = vrot.slane %v222, 1
      %v232 = vsel %vm106, %v229, %v231
      %v233 = vrot.slane %v223, 1
      %v234 = vsel %vm106, %v231, %v233
      %v239 = vadd.f32 %v214, %v230
      %v240 = vadd.f32 %v215, %v232
      %v241 = vadd.f32 %v216, %v234
      %v242 = vadd.f32 %v217, %v233
      %s243 = sld [smem:[#allocation3 + $0x8]]
      %v244 = vstv %s243
      %v245 = vmul.f32 %v86, %v244
      %v246 = vmul.f32 %v87, %v244
      %v247 = vmul.f32 %v88, %v244
      %v248 = vmul.f32 %v89, %v244
      %v253 = vrot.slane %v245, 2
      %v254 = vrot.slane %v246, 2
      %v255 = vsel %vm132, %v253, %v254
      %v256 = vrot.slane %v247, 2
      %v257 = vsel %vm132, %v254, %v256
      %v258 = vrot.slane %v248, 2
      %v259 = vsel %vm132, %v256, %v258
      %v264 = vadd.f32 %v239, %v255
      %v265 = vadd.f32 %v240, %v257
      %v266 = vadd.f32 %v241, %v259
      %v267 = vadd.f32 %v242, %v258
      %vm268 = vcmask 1041408
      %v269 = vsel %vm268, %v267, -inf
      %v270 = vmax.f32 %v264, %v265
      %v271 = vmax.f32 %v266, %v269
      %v272 = vmax.f32 %v270, %v271
      %v273 = vrot.slane %v272, 4
      %v274 = vmax.f32 %v272, %v273
      %v275 = vrot.slane %v274, 2
      %v276 = vmax.f32 %v274, %v275
      %v277 = vrot.slane %v276, 1
      %v278 = vmax.f32 %v276, %v277
      %v279 = vmax.f32 %v62, %v278
      %s280 = sld [smem:[#allocation3 + $0x9]]
      %v281 = vstv %s280
      %v282 = vmul.f32 %v72, %v281
      %v283 = vmul.f32 %v73, %v281
      %v284 = vmul.f32 %v74, %v281
      %v285 = vmul.f32 %v75, %v281
      %s286 = sld [smem:[#allocation3 + $0xa]]
      %v287 = vstv %s286
      %v288 = vmul.f32 %v72, %v287
      %v289 = vmul.f32 %v73, %v287
      %v290 = vmul.f32 %v74, %v287
      %v291 = vmul.f32 %v75, %v287
      %v296 = vrot.slane %v288, 1
      %v297 = vrot.slane %v289, 1
      %v298 = vsel %vm106, %v296, %v297
      %v299 = vrot.slane %v290, 1
      %v300 = vsel %vm106, %v297, %v299
      %v301 = vrot.slane %v291, 1
      %v302 = vsel %vm106, %v299, %v301
      %v307 = vadd.f32 %v282, %v298
      %v308 = vadd.f32 %v283, %v300
      %v309 = vadd.f32 %v284, %v302
      %v310 = vadd.f32 %v285, %v301
      %s311 = sld [smem:[#allocation3 + $0xb]]
      %v312 = vstv %s311
      %v313 = vmul.f32 %v72, %v312
      %v314 = vmul.f32 %v73, %v312
      %v315 = vmul.f32 %v74, %v312
      %v316 = vmul.f32 %v75, %v312
      %v321 = vrot.slane %v313, 2
      %v322 = vrot.slane %v314, 2
      %v323 = vsel %vm132, %v321, %v322
      %v324 = vrot.slane %v315, 2
      %v325 = vsel %vm132, %v322, %v324
      %v326 = vrot.slane %v316, 2
      %v327 = vsel %vm132, %v324, %v326
      %v332 = vadd.f32 %v307, %v323
      %v333 = vadd.f32 %v308, %v325
      %v334 = vadd.f32 %v309, %v327
      %v335 = vadd.f32 %v310, %v326
      %s336 = sld [smem:[#allocation3 + $0xc]]
      %v337 = vstv %s336
      %v338 = vmul.f32 %v79, %v337
      %v339 = vmul.f32 %v80, %v337
      %v340 = vmul.f32 %v81, %v337
      %v341 = vmul.f32 %v82, %v337
      %v342 = vadd.f32 %v332, %v338
      %v343 = vadd.f32 %v333, %v339
      %v344 = vadd.f32 %v334, %v340
      %v345 = vadd.f32 %v335, %v341
      %s346 = sld [smem:[#allocation3 + $0xd]]
      %v347 = vstv %s346
      %v348 = vmul.f32 %v79, %v347
      %v349 = vmul.f32 %v80, %v347
      %v350 = vmul.f32 %v81, %v347
      %v351 = vmul.f32 %v82, %v347
      %v356 = vrot.slane %v348, 1
      %v357 = vrot.slane %v349, 1
      %v358 = vsel %vm106, %v356, %v357
      %v359 = vrot.slane %v350, 1
      %v360 = vsel %vm106, %v357, %v359
      %v361 = vrot.slane %v351, 1
      %v362 = vsel %vm106, %v359, %v361
      %v367 = vadd.f32 %v342, %v358
      %v368 = vadd.f32 %v343, %v360
      %v369 = vadd.f32 %v344, %v362
      %v370 = vadd.f32 %v345, %v361
      %s371 = sld [smem:[#allocation3 + $0xe]]
      %v372 = vstv %s371
      %v373 = vmul.f32 %v79, %v372
      %v374 = vmul.f32 %v80, %v372
      %v375 = vmul.f32 %v81, %v372
      %v376 = vmul.f32 %v82, %v372
      %v381 = vrot.slane %v373, 2
      %v382 = vrot.slane %v374, 2
      %v383 = vsel %vm132, %v381, %v382
      %v384 = vrot.slane %v375, 2
      %v385 = vsel %vm132, %v382, %v384
      %v386 = vrot.slane %v376, 2
      %v387 = vsel %vm132, %v384, %v386
      %v392 = vadd.f32 %v367, %v383
      %v393 = vadd.f32 %v368, %v385
      %v394 = vadd.f32 %v369, %v387
      %v395 = vadd.f32 %v370, %v386
      %s396 = sld [smem:[#allocation3 + $0xf]]
      %v397 = vstv %s396
      %v398 = vmul.f32 %v86, %v397
      %v399 = vmul.f32 %v87, %v397
      %v400 = vmul.f32 %v88, %v397
      %v401 = vmul.f32 %v89, %v397
      %v402 = vadd.f32 %v392, %v398
      %v403 = vadd.f32 %v393, %v399
      %v404 = vadd.f32 %v394, %v400
      %v405 = vadd.f32 %v395, %v401
      %s406 = sld [smem:[#allocation3 + $0x10]]
      %v407 = vstv %s406
      %v408 = vmul.f32 %v86, %v407
      %v409 = vmul.f32 %v87, %v407
      %v410 = vmul.f32 %v88, %v407
      %v411 = vmul.f32 %v89, %v407
      %v416 = vrot.slane %v408, 1
      %v417 = vrot.slane %v409, 1
      %v418 = vsel %vm106, %v416, %v417
      %v419 = vrot.slane %v410, 1
      %v420 = vsel %vm106, %v417, %v419
      %v421 = vrot.slane %v411, 1
      %v422 = vsel %vm106, %v419, %v421
      %v427 = vadd.f32 %v402, %v418
      %v428 = vadd.f32 %v403, %v420
      %v429 = vadd.f32 %v404, %v422
      %v430 = vadd.f32 %v405, %v421
      %s431 = sld [smem:[#allocation3 + $0x11]]
      %v432 = vstv %s431
      %v433 = vmul.f32 %v86, %v432
      %v434 = vmul.f32 %v87, %v432
      %v435 = vmul.f32 %v88, %v432
      %v436 = vmul.f32 %v89, %v432
      %v441 = vrot.slane %v433, 2
      %v442 = vrot.slane %v434, 2
      %v443 = vsel %vm132, %v441, %v442
      %v444 = vrot.slane %v435, 2
      %v445 = vsel %vm132, %v442, %v444
      %v446 = vrot.slane %v436, 2
      %v447 = vsel %vm132, %v444, %v446
      %v452 = vadd.f32 %v427, %v443
      %v453 = vadd.f32 %v428, %v445
      %v454 = vadd.f32 %v429, %v447
      %v455 = vadd.f32 %v430, %v446
      %v456 = vsel %vm268, %v455, -inf
      %v457 = vmax.f32 %v452, %v453
      %v458 = vmax.f32 %v454, %v456
      %v459 = vmax.f32 %v457, %v458
      %v460 = vrot.slane %v459, 4
      %v461 = vmax.f32 %v459, %v460
      %v462 = vrot.slane %v461, 2
      %v463 = vmax.f32 %v461, %v462
      %v464 = vrot.slane %v463, 1
      %v465 = vmax.f32 %v463, %v464
      %v466 = vmax.f32 %v63, %v465
      %s467 = sld [smem:[#allocation3 + $0x12]]
      %v468 = vstv %s467
      %v469 = vmul.f32 %v72, %v468
      %v470 = vmul.f32 %v73, %v468
      %v471 = vmul.f32 %v74, %v468
      %v472 = vmul.f32 %v75, %v468
      %s473 = sld [smem:[#allocation3 + $0x13]]
      %v474 = vstv %s473
      %v475 = vmul.f32 %v72, %v474
      %v476 = vmul.f32 %v73, %v474
      %v477 = vmul.f32 %v74, %v474
      %v478 = vmul.f32 %v75, %v474
      %v483 = vrot.slane %v475, 1
      %v484 = vrot.slane %v476, 1
      %v485 = vsel %vm106, %v483, %v484
      %v486 = vrot.slane %v477, 1
      %v487 = vsel %vm106, %v484, %v486
      %v488 = vrot.slane %v478, 1
      %v489 = vsel %vm106, %v486, %v488
      %v494 = vadd.f32 %v469, %v485
      %v495 = vadd.f32 %v470, %v487
      %v496 = vadd.f32 %v471, %v489
      %v497 = vadd.f32 %v472, %v488
      %s498 = sld [smem:[#allocation3 + $0x14]]
      %v499 = vstv %s498
      %v500 = vmul.f32 %v72, %v499
      %v501 = vmul.f32 %v73, %v499
      %v502 = vmul.f32 %v74, %v499
      %v503 = vmul.f32 %v75, %v499
      %v508 = vrot.slane %v500, 2
      %v509 = vrot.slane %v501, 2
      %v510 = vsel %vm132, %v508, %v509
      %v511 = vrot.slane %v502, 2
      %v512 = vsel %vm132, %v509, %v511
      %v513 = vrot.slane %v503, 2
      %v514 = vsel %vm132, %v511, %v513
      %v519 = vadd.f32 %v494, %v510
      %v520 = vadd.f32 %v495, %v512
      %v521 = vadd.f32 %v496, %v514
      %v522 = vadd.f32 %v497, %v513
      %s523 = sld [smem:[#allocation3 + $0x15]]
      %v524 = vstv %s523
      %v525 = vmul.f32 %v79, %v524
      %v526 = vmul.f32 %v80, %v524
      %v527 = vmul.f32 %v81, %v524
      %v528 = vmul.f32 %v82, %v524
      %v529 = vadd.f32 %v519, %v525
      %v530 = vadd.f32 %v520, %v526
      %v531 = vadd.f32 %v521, %v527
      %v532 = vadd.f32 %v522, %v528
      %s533 = sld [smem:[#allocation3 + $0x16]]
      %v534 = vstv %s533
      %v535 = vmul.f32 %v79, %v534
      %v536 = vmul.f32 %v80, %v534
      %v537 = vmul.f32 %v81, %v534
      %v538 = vmul.f32 %v82, %v534
      %v543 = vrot.slane %v535, 1
      %v544 = vrot.slane %v536, 1
      %v545 = vsel %vm106, %v543, %v544
      %v546 = vrot.slane %v537, 1
      %v547 = vsel %vm106, %v544, %v546
      %v548 = vrot.slane %v538, 1
      %v549 = vsel %vm106, %v546, %v548
      %v554 = vadd.f32 %v529, %v545
      %v555 = vadd.f32 %v530, %v547
      %v556 = vadd.f32 %v531, %v549
      %v557 = vadd.f32 %v532, %v548
      %s558 = sld [smem:[#allocation3 + $0x17]]
      %v559 = vstv %s558
      %v560 = vmul.f32 %v79, %v559
      %v561 = vmul.f32 %v80, %v559
      %v562 = vmul.f32 %v81, %v559
      %v563 = vmul.f32 %v82, %v559
      %v568 = vrot.slane %v560, 2
      %v569 = vrot.slane %v561, 2
      %v570 = vsel %vm132, %v568, %v569
      %v571 = vrot.slane %v562, 2
      %v572 = vsel %vm132, %v569, %v571
      %v573 = vrot.slane %v563, 2
      %v574 = vsel %vm132, %v571, %v573
      %v579 = vadd.f32 %v554, %v570
      %v580 = vadd.f32 %v555, %v572
      %v581 = vadd.f32 %v556, %v574
      %v582 = vadd.f32 %v557, %v573
      %s583 = sld [smem:[#allocation3 + $0x18]]
      %v584 = vstv %s583
      %v585 = vmul.f32 %v86, %v584
      %v586 = vmul.f32 %v87, %v584
      %v587 = vmul.f32 %v88, %v584
      %v588 = vmul.f32 %v89, %v584
      %v589 = vadd.f32 %v579, %v585
      %v590 = vadd.f32 %v580, %v586
      %v591 = vadd.f32 %v581, %v587
      %v592 = vadd.f32 %v582, %v588
      %s593 = sld [smem:[#allocation3 + $0x19]]
      %v594 = vstv %s593
      %v595 = vmul.f32 %v86, %v594
      %v596 = vmul.f32 %v87, %v594
      %v597 = vmul.f32 %v88, %v594
      %v598 = vmul.f32 %v89, %v594
      %v603 = vrot.slane %v595, 1
      %v604 = vrot.slane %v596, 1
      %v605 = vsel %vm106, %v603, %v604
      %v606 = vrot.slane %v597, 1
      %v607 = vsel %vm106, %v604, %v606
      %v608 = vrot.slane %v598, 1
      %v609 = vsel %vm106, %v606, %v608
      %v614 = vadd.f32 %v589, %v605
      %v615 = vadd.f32 %v590, %v607
      %v616 = vadd.f32 %v591, %v609
      %v617 = vadd.f32 %v592, %v608
      %s618 = sld [smem:[#allocation3 + $0x1a]]
      %v619 = vstv %s618
      %v620 = vmul.f32 %v86, %v619
      %v621 = vmul.f32 %v87, %v619
      %v622 = vmul.f32 %v88, %v619
      %v623 = vmul.f32 %v89, %v619
      %v628 = vrot.slane %v620, 2
      %v629 = vrot.slane %v621, 2
      %v630 = vsel %vm132, %v628, %v629
      %v631 = vrot.slane %v622, 2
      %v632 = vsel %vm132, %v629, %v631
      %v633 = vrot.slane %v623, 2
      %v634 = vsel %vm132, %v631, %v633
      %v639 = vadd.f32 %v614, %v630
      %v640 = vadd.f32 %v615, %v632
      %v641 = vadd.f32 %v616, %v634
      %v642 = vadd.f32 %v617, %v633
      %v643 = vsel %vm268, %v642, -inf
      %v644 = vmax.f32 %v639, %v640
      %v645 = vmax.f32 %v641, %v643
      %v646 = vmax.f32 %v644, %v645
      %v647 = vrot.slane %v646, 4
      %v648 = vmax.f32 %v646, %v647
      %v649 = vrot.slane %v648, 2
      %v650 = vmax.f32 %v648, %v649
      %v651 = vrot.slane %v650, 1
      %v652 = vmax.f32 %v650, %v651
      %v653 = vmax.f32 %v64, %v652
      %s654 = sld [smem:[#allocation3 + $0x1b]]
      %v655 = vstv %s654
      %v656 = vmul.f32 %v72, %v655
      %v657 = vmul.f32 %v73, %v655
      %v658 = vmul.f32 %v74, %v655
      %v659 = vmul.f32 %v75, %v655
      %s660 = sld [smem:[#allocation3 + $0x1c]]
      %v661 = vstv %s660
      %v662 = vmul.f32 %v72, %v661
      %v663 = vmul.f32 %v73, %v661
      %v664 = vmul.f32 %v74, %v661
      %v665 = vmul.f32 %v75, %v661
      %v670 = vrot.slane %v662, 1
      %v671 = vrot.slane %v663, 1
      %v672 = vsel %vm106, %v670, %v671
      %v673 = vrot.slane %v664, 1
      %v674 = vsel %vm106, %v671, %v673
      %v675 = vrot.slane %v665, 1
      %v676 = vsel %vm106, %v673, %v675
      %v681 = vadd.f32 %v656, %v672
      %v682 = vadd.f32 %v657, %v674
      %v683 = vadd.f32 %v658, %v676
      %v684 = vadd.f32 %v659, %v675
      %s685 = sld [smem:[#allocation3 + $0x1d]]
      %v686 = vstv %s685
      %v687 = vmul.f32 %v72, %v686
      %v688 = vmul.f32 %v73, %v686
      %v689 = vmul.f32 %v74, %v686
      %v690 = vmul.f32 %v75, %v686
      %v695 = vrot.slane %v687, 2
      %v696 = vrot.slane %v688, 2
      %v697 = vsel %vm132, %v695, %v696
      %v698 = vrot.slane %v689, 2
      %v699 = vsel %vm132, %v696, %v698
      %v700 = vrot.slane %v690, 2
      %v701 = vsel %vm132, %v698, %v700
      %v706 = vadd.f32 %v681, %v697
      %v707 = vadd.f32 %v682, %v699
      %v708 = vadd.f32 %v683, %v701
      %v709 = vadd.f32 %v684, %v700
      %s710 = sld [smem:[#allocation3 + $0x1e]]
      %v711 = vstv %s710
      %v712 = vmul.f32 %v79, %v711
      %v713 = vmul.f32 %v80, %v711
      %v714 = vmul.f32 %v81, %v711
      %v715 = vmul.f32 %v82, %v711
      %v716 = vadd.f32 %v706, %v712
      %v717 = vadd.f32 %v707, %v713
      %v718 = vadd.f32 %v708, %v714
      %v719 = vadd.f32 %v709, %v715
      %s720 = sld [smem:[#allocation3 + $0x1f]]
      %v721 = vstv %s720
      %v722 = vmul.f32 %v79, %v721
      %v723 = vmul.f32 %v80, %v721
      %v724 = vmul.f32 %v81, %v721
      %v725 = vmul.f32 %v82, %v721
      %v730 = vrot.slane %v722, 1
      %v731 = vrot.slane %v723, 1
      %v732 = vsel %vm106, %v730, %v731
      %v733 = vrot.slane %v724, 1
      %v734 = vsel %vm106, %v731, %v733
      %v735 = vrot.slane %v725, 1
      %v736 = vsel %vm106, %v733, %v735
      %v741 = vadd.f32 %v716, %v732
      %v742 = vadd.f32 %v717, %v734
      %v743 = vadd.f32 %v718, %v736
      %v744 = vadd.f32 %v719, %v735
      %s745 = sld [smem:[#allocation3 + $0x20]]
      %v746 = vstv %s745
      %v747 = vmul.f32 %v79, %v746
      %v748 = vmul.f32 %v80, %v746
      %v749 = vmul.f32 %v81, %v746
      %v750 = vmul.f32 %v82, %v746
      %v755 = vrot.slane %v747, 2
      %v756 = vrot.slane %v748, 2
      %v757 = vsel %vm132, %v755, %v756
      %v758 = vrot.slane %v749, 2
      %v759 = vsel %vm132, %v756, %v758
      %v760 = vrot.slane %v750, 2
      %v761 = vsel %vm132, %v758, %v760
      %v766 = vadd.f32 %v741, %v757
      %v767 = vadd.f32 %v742, %v759
      %v768 = vadd.f32 %v743, %v761
      %v769 = vadd.f32 %v744, %v760
      %s770 = sld [smem:[#allocation3 + $0x21]]
      %v771 = vstv %s770
      %v772 = vmul.f32 %v86, %v771
      %v773 = vmul.f32 %v87, %v771
      %v774 = vmul.f32 %v88, %v771
      %v775 = vmul.f32 %v89, %v771
      %v776 = vadd.f32 %v766, %v772
      %v777 = vadd.f32 %v767, %v773
      %v778 = vadd.f32 %v768, %v774
      %v779 = vadd.f32 %v769, %v775
      %s780 = sld [smem:[#allocation3 + $0x22]]
      %v781 = vstv %s780
      %v782 = vmul.f32 %v86, %v781
      %v783 = vmul.f32 %v87, %v781
      %v784 = vmul.f32 %v88, %v781
      %v785 = vmul.f32 %v89, %v781
      %v790 = vrot.slane %v782, 1
      %v791 = vrot.slane %v783, 1
      %v792 = vsel %vm106, %v790, %v791
      %v793 = vrot.slane %v784, 1
      %v794 = vsel %vm106, %v791, %v793
      %v795 = vrot.slane %v785, 1
      %v796 = vsel %vm106, %v793, %v795
      %v801 = vadd.f32 %v776, %v792
      %v802 = vadd.f32 %v777, %v794
      %v803 = vadd.f32 %v778, %v796
      %v804 = vadd.f32 %v779, %v795
      %s805 = sld [smem:[#allocation3 + $0x23]]
      %v806 = vstv %s805
      %v807 = vmul.f32 %v86, %v806
      %v808 = vmul.f32 %v87, %v806
      %v809 = vmul.f32 %v88, %v806
      %v810 = vmul.f32 %v89, %v806
      %v815 = vrot.slane %v807, 2
      %v816 = vrot.slane %v808, 2
      %v817 = vsel %vm132, %v815, %v816
      %v818 = vrot.slane %v809, 2
      %v819 = vsel %vm132, %v816, %v818
      %v820 = vrot.slane %v810, 2
      %v821 = vsel %vm132, %v818, %v820
      %v826 = vadd.f32 %v801, %v817
      %v827 = vadd.f32 %v802, %v819
      %v828 = vadd.f32 %v803, %v821
      %v829 = vadd.f32 %v804, %v820
      %v830 = vsel %vm268, %v829, -inf
      %v831 = vmax.f32 %v826, %v827
      %v832 = vmax.f32 %v828, %v830
      %v833 = vmax.f32 %v831, %v832
      %v834 = vrot.slane %v833, 4
      %v835 = vmax.f32 %v833, %v834
      %v836 = vrot.slane %v835, 2
      %v837 = vmax.f32 %v835, %v836
      %v838 = vrot.slane %v837, 1
      %v839 = vmax.f32 %v837, %v838
      %v840 = vmax.f32 %v65, %v839
      %s841 = sld [smem:[#allocation3 + $0x24]]
      %v842 = vstv %s841
      %v843 = vmul.f32 %v72, %v842
      %v844 = vmul.f32 %v73, %v842
      %v845 = vmul.f32 %v74, %v842
      %v846 = vmul.f32 %v75, %v842
      %s847 = sld [smem:[#allocation3 + $0x25]]
      %v848 = vstv %s847
      %v849 = vmul.f32 %v72, %v848
      %v850 = vmul.f32 %v73, %v848
      %v851 = vmul.f32 %v74, %v848
      %v852 = vmul.f32 %v75, %v848
      %v857 = vrot.slane %v849, 1
      %v858 = vrot.slane %v850, 1
      %v859 = vsel %vm106, %v857, %v858
      %v860 = vrot.slane %v851, 1
      %v861 = vsel %vm106, %v858, %v860
      %v862 = vrot.slane %v852, 1
      %v863 = vsel %vm106, %v860, %v862
      %v868 = vadd.f32 %v843, %v859
      %v869 = vadd.f32 %v844, %v861
      %v870 = vadd.f32 %v845, %v863
      %v871 = vadd.f32 %v846, %v862
      %s872 = sld [smem:[#allocation3 + $0x26]]
      %v873 = vstv %s872
      %v874 = vmul.f32 %v72, %v873
      %v875 = vmul.f32 %v73, %v873
      %v876 = vmul.f32 %v74, %v873
      %v877 = vmul.f32 %v75, %v873
      %v882 = vrot.slane %v874, 2
      %v883 = vrot.slane %v875, 2
      %v884 = vsel %vm132, %v882, %v883
      %v885 = vrot.slane %v876, 2
      %v886 = vsel %vm132, %v883, %v885
      %v887 = vrot.slane %v877, 2
      %v888 = vsel %vm132, %v885, %v887
      %v893 = vadd.f32 %v868, %v884
      %v894 = vadd.f32 %v869, %v886
      %v895 = vadd.f32 %v870, %v888
      %v896 = vadd.f32 %v871, %v887
      %s897 = sld [smem:[#allocation3 + $0x27]]
      %v898 = vstv %s897
      %v899 = vmul.f32 %v79, %v898
      %v900 = vmul.f32 %v80, %v898
      %v901 = vmul.f32 %v81, %v898
      %v902 = vmul.f32 %v82, %v898
      %v903 = vadd.f32 %v893, %v899
      %v904 = vadd.f32 %v894, %v900
      %v905 = vadd.f32 %v895, %v901
      %v906 = vadd.f32 %v896, %v902
      %s907 = sld [smem:[#allocation3 + $0x28]]
      %v908 = vstv %s907
      %v909 = vmul.f32 %v79, %v908
      %v910 = vmul.f32 %v80, %v908
      %v911 = vmul.f32 %v81, %v908
      %v912 = vmul.f32 %v82, %v908
      %v917 = vrot.slane %v909, 1
      %v918 = vrot.slane %v910, 1
      %v919 = vsel %vm106, %v917, %v918
      %v920 = vrot.slane %v911, 1
      %v921 = vsel %vm106, %v918, %v920
      %v922 = vrot.slane %v912, 1
      %v923 = vsel %vm106, %v920, %v922
      %v928 = vadd.f32 %v903, %v919
      %v929 = vadd.f32 %v904, %v921
      %v930 = vadd.f32 %v905, %v923
      %v931 = vadd.f32 %v906, %v922
      %s932 = sld [smem:[#allocation3 + $0x29]]
      %v933 = vstv %s932
      %v934 = vmul.f32 %v79, %v933
      %v935 = vmul.f32 %v80, %v933
      %v936 = vmul.f32 %v81, %v933
      %v937 = vmul.f32 %v82, %v933
      %v942 = vrot.slane %v934, 2
      %v943 = vrot.slane %v935, 2
      %v944 = vsel %vm132, %v942, %v943
      %v945 = vrot.slane %v936, 2
      %v946 = vsel %vm132, %v943, %v945
      %v947 = vrot.slane %v937, 2
      %v948 = vsel %vm132, %v945, %v947
      %v953 = vadd.f32 %v928, %v944
      %v954 = vadd.f32 %v929, %v946
      %v955 = vadd.f32 %v930, %v948
      %v956 = vadd.f32 %v931, %v947
      %s957 = sld [smem:[#allocation3 + $0x2a]]
      %v958 = vstv %s957
      %v959 = vmul.f32 %v86, %v958
      %v960 = vmul.f32 %v87, %v958
      %v961 = vmul.f32 %v88, %v958
      %v962 = vmul.f32 %v89, %v958
      %v963 = vadd.f32 %v953, %v959
      %v964 = vadd.f32 %v954, %v960
      %v965 = vadd.f32 %v955, %v961
      %v966 = vadd.f32 %v956, %v962
      %s967 = sld [smem:[#allocation3 + $0x2b]]
      %v968 = vstv %s967
      %v969 = vmul.f32 %v86, %v968
      %v970 = vmul.f32 %v87, %v968
      %v971 = vmul.f32 %v88, %v968
      %v972 = vmul.f32 %v89, %v968
      %v977 = vrot.slane %v969, 1
      %v978 = vrot.slane %v970, 1
      %v979 = vsel %vm106, %v977, %v978
      %v980 = vrot.slane %v971, 1
      %v981 = vsel %vm106, %v978, %v980
      %v982 = vrot.slane %v972, 1
      %v983 = vsel %vm106, %v980, %v982
      %v988 = vadd.f32 %v963, %v979
      %v989 = vadd.f32 %v964, %v981
      %v990 = vadd.f32 %v965, %v983
      %v991 = vadd.f32 %v966, %v982
      %s992 = sld [smem:[#allocation3 + $0x2c]]
      %v993 = vstv %s992
      %v994 = vmul.f32 %v86, %v993
      %v995 = vmul.f32 %v87, %v993
      %v996 = vmul.f32 %v88, %v993
      %v997 = vmul.f32 %v89, %v993
      %v1002 = vrot.slane %v994, 2
      %v1003 = vrot.slane %v995, 2
      %v1004 = vsel %vm132, %v1002, %v1003
      %v1005 = vrot.slane %v996, 2
      %v1006 = vsel %vm132, %v1003, %v1005
      %v1007 = vrot.slane %v997, 2
      %v1008 = vsel %vm132, %v1005, %v1007
      %v1013 = vadd.f32 %v988, %v1004
      %v1014 = vadd.f32 %v989, %v1006
      %v1015 = vadd.f32 %v990, %v1008
      %v1016 = vadd.f32 %v991, %v1007
      %v1017 = vsel %vm268, %v1016, -inf
      %v1018 = vmax.f32 %v1013, %v1014
      %v1019 = vmax.f32 %v1015, %v1017
      %v1020 = vmax.f32 %v1018, %v1019
      %v1021 = vrot.slane %v1020, 4
      %v1022 = vmax.f32 %v1020, %v1021
      %v1023 = vrot.slane %v1022, 2
      %v1024 = vmax.f32 %v1022, %v1023
      %v1025 = vrot.slane %v1024, 1
      %v1026 = vmax.f32 %v1024, %v1025
      %v1027 = vmax.f32 %v66, %v1026
      %s1028 = sld [smem:[#allocation3 + $0x2d]]
      %v1029 = vstv %s1028
      %v1030 = vmul.f32 %v72, %v1029
      %v1031 = vmul.f32 %v73, %v1029
      %v1032 = vmul.f32 %v74, %v1029
      %v1033 = vmul.f32 %v75, %v1029
      %s1034 = sld [smem:[#allocation3 + $0x2e]]
      %v1035 = vstv %s1034
      %v1036 = vmul.f32 %v72, %v1035
      %v1037 = vmul.f32 %v73, %v1035
      %v1038 = vmul.f32 %v74, %v1035
      %v1039 = vmul.f32 %v75, %v1035
      %v1044 = vrot.slane %v1036, 1
      %v1045 = vrot.slane %v1037, 1
      %v1046 = vsel %vm106, %v1044, %v1045
      %v1047 = vrot.slane %v1038, 1
      %v1048 = vsel %vm106, %v1045, %v1047
      %v1049 = vrot.slane %v1039, 1
      %v1050 = vsel %vm106, %v1047, %v1049
      %v1055 = vadd.f32 %v1030, %v1046
      %v1056 = vadd.f32 %v1031, %v1048
      %v1057 = vadd.f32 %v1032, %v1050
      %v1058 = vadd.f32 %v1033, %v1049
      %s1059 = sld [smem:[#allocation3 + $0x2f]]
      %v1060 = vstv %s1059
      %v1061 = vmul.f32 %v72, %v1060
      %v1062 = vmul.f32 %v73, %v1060
      %v1063 = vmul.f32 %v74, %v1060
      %v1064 = vmul.f32 %v75, %v1060
      %v1069 = vrot.slane %v1061, 2
      %v1070 = vrot.slane %v1062, 2
      %v1071 = vsel %vm132, %v1069, %v1070
      %v1072 = vrot.slane %v1063, 2
      %v1073 = vsel %vm132, %v1070, %v1072
      %v1074 = vrot.slane %v1064, 2
      %v1075 = vsel %vm132, %v1072, %v1074
      %v1080 = vadd.f32 %v1055, %v1071
      %v1081 = vadd.f32 %v1056, %v1073
      %v1082 = vadd.f32 %v1057, %v1075
      %v1083 = vadd.f32 %v1058, %v1074
      %s1084 = sld [smem:[#allocation3 + $0x30]]
      %v1085 = vstv %s1084
      %v1086 = vmul.f32 %v79, %v1085
      %v1087 = vmul.f32 %v80, %v1085
      %v1088 = vmul.f32 %v81, %v1085
      %v1089 = vmul.f32 %v82, %v1085
      %v1090 = vadd.f32 %v1080, %v1086
      %v1091 = vadd.f32 %v1081, %v1087
      %v1092 = vadd.f32 %v1082, %v1088
      %v1093 = vadd.f32 %v1083, %v1089
      %s1094 = sld [smem:[#allocation3 + $0x31]]
      %v1095 = vstv %s1094
      %v1096 = vmul.f32 %v79, %v1095
      %v1097 = vmul.f32 %v80, %v1095
      %v1098 = vmul.f32 %v81, %v1095
      %v1099 = vmul.f32 %v82, %v1095
      %v1104 = vrot.slane %v1096, 1
      %v1105 = vrot.slane %v1097, 1
      %v1106 = vsel %vm106, %v1104, %v1105
      %v1107 = vrot.slane %v1098, 1
      %v1108 = vsel %vm106, %v1105, %v1107
      %v1109 = vrot.slane %v1099, 1
      %v1110 = vsel %vm106, %v1107, %v1109
      %v1115 = vadd.f32 %v1090, %v1106
      %v1116 = vadd.f32 %v1091, %v1108
      %v1117 = vadd.f32 %v1092, %v1110
      %v1118 = vadd.f32 %v1093, %v1109
      %s1119 = sld [smem:[#allocation3 + $0x32]]
      %v1120 = vstv %s1119
      %v1121 = vmul.f32 %v79, %v1120
      %v1122 = vmul.f32 %v80, %v1120
      %v1123 = vmul.f32 %v81, %v1120
      %v1124 = vmul.f32 %v82, %v1120
      %v1129 = vrot.slane %v1121, 2
      %v1130 = vrot.slane %v1122, 2
      %v1131 = vsel %vm132, %v1129, %v1130
      %v1132 = vrot.slane %v1123, 2
      %v1133 = vsel %vm132, %v1130, %v1132
      %v1134 = vrot.slane %v1124, 2
      %v1135 = vsel %vm132, %v1132, %v1134
      %v1140 = vadd.f32 %v1115, %v1131
      %v1141 = vadd.f32 %v1116, %v1133
      %v1142 = vadd.f32 %v1117, %v1135
      %v1143 = vadd.f32 %v1118, %v1134
      %s1144 = sld [smem:[#allocation3 + $0x33]]
      %v1145 = vstv %s1144
      %v1146 = vmul.f32 %v86, %v1145
      %v1147 = vmul.f32 %v87, %v1145
      %v1148 = vmul.f32 %v88, %v1145
      %v1149 = vmul.f32 %v89, %v1145
      %v1150 = vadd.f32 %v1140, %v1146
      %v1151 = vadd.f32 %v1141, %v1147
      %v1152 = vadd.f32 %v1142, %v1148
      %v1153 = vadd.f32 %v1143, %v1149
      %s1154 = sld [smem:[#allocation3 + $0x34]]
      %v1155 = vstv %s1154
      %v1156 = vmul.f32 %v86, %v1155
      %v1157 = vmul.f32 %v87, %v1155
      %v1158 = vmul.f32 %v88, %v1155
      %v1159 = vmul.f32 %v89, %v1155
      %v1164 = vrot.slane %v1156, 1
      %v1165 = vrot.slane %v1157, 1
      %v1166 = vsel %vm106, %v1164, %v1165
      %v1167 = vrot.slane %v1158, 1
      %v1168 = vsel %vm106, %v1165, %v1167
      %v1169 = vrot.slane %v1159, 1
      %v1170 = vsel %vm106, %v1167, %v1169
      %v1175 = vadd.f32 %v1150, %v1166
      %v1176 = vadd.f32 %v1151, %v1168
      %v1177 = vadd.f32 %v1152, %v1170
      %v1178 = vadd.f32 %v1153, %v1169
      %s1179 = sld [smem:[#allocation3 + $0x35]]
      %v1180 = vstv %s1179
      %v1181 = vmul.f32 %v86, %v1180
      %v1182 = vmul.f32 %v87, %v1180
      %v1183 = vmul.f32 %v88, %v1180
      %v1184 = vmul.f32 %v89, %v1180
      %v1189 = vrot.slane %v1181, 2
      %v1190 = vrot.slane %v1182, 2
      %v1191 = vsel %vm132, %v1189, %v1190
      %v1192 = vrot.slane %v1183, 2
      %v1193 = vsel %vm132, %v1190, %v1192
      %v1194 = vrot.slane %v1184, 2
      %v1195 = vsel %vm132, %v1192, %v1194
      %v1200 = vadd.f32 %v1175, %v1191
      %v1201 = vadd.f32 %v1176, %v1193
      %v1202 = vadd.f32 %v1177, %v1195
      %v1203 = vadd.f32 %v1178, %v1194
      %v1204 = vsel %vm268, %v1203, -inf
      %v1205 = vmax.f32 %v1200, %v1201
      %v1206 = vmax.f32 %v1202, %v1204
      %v1207 = vmax.f32 %v1205, %v1206
      %v1208 = vrot.slane %v1207, 4
      %v1209 = vmax.f32 %v1207, %v1208
      %v1210 = vrot.slane %v1209, 2
      %v1211 = vmax.f32 %v1209, %v1210
      %v1212 = vrot.slane %v1211, 1
      %v1213 = vmax.f32 %v1211, %v1212
      %v1214 = vmax.f32 %v67, %v1213
      %s1215 = sld [smem:[#allocation3 + $0x36]]
      %v1216 = vstv %s1215
      %v1217 = vmul.f32 %v72, %v1216
      %v1218 = vmul.f32 %v73, %v1216
      %v1219 = vmul.f32 %v74, %v1216
      %v1220 = vmul.f32 %v75, %v1216
      %s1221 = sld [smem:[#allocation3 + $0x37]]
      %v1222 = vstv %s1221
      %v1223 = vmul.f32 %v72, %v1222
      %v1224 = vmul.f32 %v73, %v1222
      %v1225 = vmul.f32 %v74, %v1222
      %v1226 = vmul.f32 %v75, %v1222
      %v1231 = vrot.slane %v1223, 1
      %v1232 = vrot.slane %v1224, 1
      %v1233 = vsel %vm106, %v1231, %v1232
      %v1234 = vrot.slane %v1225, 1
      %v1235 = vsel %vm106, %v1232, %v1234
      %v1236 = vrot.slane %v1226, 1
      %v1237 = vsel %vm106, %v1234, %v1236
      %v1242 = vadd.f32 %v1217, %v1233
      %v1243 = vadd.f32 %v1218, %v1235
      %v1244 = vadd.f32 %v1219, %v1237
      %v1245 = vadd.f32 %v1220, %v1236
      %s1246 = sld [smem:[#allocation3 + $0x38]]
      %v1247 = vstv %s1246
      %v1248 = vmul.f32 %v72, %v1247
      %v1249 = vmul.f32 %v73, %v1247
      %v1250 = vmul.f32 %v74, %v1247
      %v1251 = vmul.f32 %v75, %v1247
      %v1256 = vrot.slane %v1248, 2
      %v1257 = vrot.slane %v1249, 2
      %v1258 = vsel %vm132, %v1256, %v1257
      %v1259 = vrot.slane %v1250, 2
      %v1260 = vsel %vm132, %v1257, %v1259
      %v1261 = vrot.slane %v1251, 2
      %v1262 = vsel %vm132, %v1259, %v1261
      %v1267 = vadd.f32 %v1242, %v1258
      %v1268 = vadd.f32 %v1243, %v1260
      %v1269 = vadd.f32 %v1244, %v1262
      %v1270 = vadd.f32 %v1245, %v1261
      %s1271 = sld [smem:[#allocation3 + $0x39]]
      %v1272 = vstv %s1271
      %v1273 = vmul.f32 %v79, %v1272
      %v1274 = vmul.f32 %v80, %v1272
      %v1275 = vmul.f32 %v81, %v1272
      %v1276 = vmul.f32 %v82, %v1272
      %v1277 = vadd.f32 %v1267, %v1273
      %v1278 = vadd.f32 %v1268, %v1274
      %v1279 = vadd.f32 %v1269, %v1275
      %v1280 = vadd.f32 %v1270, %v1276
      %s1281 = sld [smem:[#allocation3 + $0x3a]]
      %v1282 = vstv %s1281
      %v1283 = vmul.f32 %v79, %v1282
      %v1284 = vmul.f32 %v80, %v1282
      %v1285 = vmul.f32 %v81, %v1282
      %v1286 = vmul.f32 %v82, %v1282
      %v1291 = vrot.slane %v1283, 1
      %v1292 = vrot.slane %v1284, 1
      %v1293 = vsel %vm106, %v1291, %v1292
      %v1294 = vrot.slane %v1285, 1
      %v1295 = vsel %vm106, %v1292, %v1294
      %v1296 = vrot.slane %v1286, 1
      %v1297 = vsel %vm106, %v1294, %v1296
      %v1302 = vadd.f32 %v1277, %v1293
      %v1303 = vadd.f32 %v1278, %v1295
      %v1304 = vadd.f32 %v1279, %v1297
      %v1305 = vadd.f32 %v1280, %v1296
      %s1306 = sld [smem:[#allocation3 + $0x3b]]
      %v1307 = vstv %s1306
      %v1308 = vmul.f32 %v79, %v1307
      %v1309 = vmul.f32 %v80, %v1307
      %v1310 = vmul.f32 %v81, %v1307
      %v1311 = vmul.f32 %v82, %v1307
      %v1316 = vrot.slane %v1308, 2
      %v1317 = vrot.slane %v1309, 2
      %v1318 = vsel %vm132, %v1316, %v1317
      %v1319 = vrot.slane %v1310, 2
      %v1320 = vsel %vm132, %v1317, %v1319
      %v1321 = vrot.slane %v1311, 2
      %v1322 = vsel %vm132, %v1319, %v1321
      %v1327 = vadd.f32 %v1302, %v1318
      %v1328 = vadd.f32 %v1303, %v1320
      %v1329 = vadd.f32 %v1304, %v1322
      %v1330 = vadd.f32 %v1305, %v1321
      %s1331 = sld [smem:[#allocation3 + $0x3c]]
      %v1332 = vstv %s1331
      %v1333 = vmul.f32 %v86, %v1332
      %v1334 = vmul.f32 %v87, %v1332
      %v1335 = vmul.f32 %v88, %v1332
      %v1336 = vmul.f32 %v89, %v1332
      %v1337 = vadd.f32 %v1327, %v1333
      %v1338 = vadd.f32 %v1328, %v1334
      %v1339 = vadd.f32 %v1329, %v1335
      %v1340 = vadd.f32 %v1330, %v1336
      %s1341 = sld [smem:[#allocation3 + $0x3d]]
      %v1342 = vstv %s1341
      %v1343 = vmul.f32 %v86, %v1342
      %v1344 = vmul.f32 %v87, %v1342
      %v1345 = vmul.f32 %v88, %v1342
      %v1346 = vmul.f32 %v89, %v1342
      %v1351 = vrot.slane %v1343, 1
      %v1352 = vrot.slane %v1344, 1
      %v1353 = vsel %vm106, %v1351, %v1352
      %v1354 = vrot.slane %v1345, 1
      %v1355 = vsel %vm106, %v1352, %v1354
      %v1356 = vrot.slane %v1346, 1
      %v1357 = vsel %vm106, %v1354, %v1356
      %v1362 = vadd.f32 %v1337, %v1353
      %v1363 = vadd.f32 %v1338, %v1355
      %v1364 = vadd.f32 %v1339, %v1357
      %v1365 = vadd.f32 %v1340, %v1356
      %s1366 = sld [smem:[#allocation3 + $0x3e]]
      %v1367 = vstv %s1366
      %v1368 = vmul.f32 %v86, %v1367
      %v1369 = vmul.f32 %v87, %v1367
      %v1370 = vmul.f32 %v88, %v1367
      %v1371 = vmul.f32 %v89, %v1367
      %v1376 = vrot.slane %v1368, 2
      %v1377 = vrot.slane %v1369, 2
      %v1378 = vsel %vm132, %v1376, %v1377
      %v1379 = vrot.slane %v1370, 2
      %v1380 = vsel %vm132, %v1377, %v1379
      %v1381 = vrot.slane %v1371, 2
      %v1382 = vsel %vm132, %v1379, %v1381
      %v1387 = vadd.f32 %v1362, %v1378
      %v1388 = vadd.f32 %v1363, %v1380
      %v1389 = vadd.f32 %v1364, %v1382
      %v1390 = vadd.f32 %v1365, %v1381
      %v1391 = vsel %vm268, %v1390, -inf
      %v1392 = vmax.f32 %v1387, %v1388
      %v1393 = vmax.f32 %v1389, %v1391
      %v1394 = vmax.f32 %v1392, %v1393
      %v1395 = vrot.slane %v1394, 4
      %v1396 = vmax.f32 %v1394, %v1395
      %v1397 = vrot.slane %v1396, 2
      %v1398 = vmax.f32 %v1396, %v1397
      %v1399 = vrot.slane %v1398, 1
      %v1400 = vmax.f32 %v1398, %v1399
      %v1401 = vmax.f32 %v68, %v1400
      %s1402 = sld [smem:[#allocation3 + $0x3f]]
      %v1403 = vstv %s1402
      %v1404 = vmul.f32 %v72, %v1403
      %v1405 = vmul.f32 %v73, %v1403
      %v1406 = vmul.f32 %v74, %v1403
      %v1407 = vmul.f32 %v75, %v1403
      %s1408 = sld [smem:[#allocation3 + $0x40]]
      %v1409 = vstv %s1408
      %v1410 = vmul.f32 %v72, %v1409
      %v1411 = vmul.f32 %v73, %v1409
      %v1412 = vmul.f32 %v74, %v1409
      %v1413 = vmul.f32 %v75, %v1409
      %v1418 = vrot.slane %v1410, 1
      %v1419 = vrot.slane %v1411, 1
      %v1420 = vsel %vm106, %v1418, %v1419
      %v1421 = vrot.slane %v1412, 1
      %v1422 = vsel %vm106, %v1419, %v1421
      %v1423 = vrot.slane %v1413, 1
      %v1424 = vsel %vm106, %v1421, %v1423
      %v1429 = vadd.f32 %v1404, %v1420
      %v1430 = vadd.f32 %v1405, %v1422
      %v1431 = vadd.f32 %v1406, %v1424
      %v1432 = vadd.f32 %v1407, %v1423
      %s1433 = sld [smem:[#allocation3 + $0x41]]
      %v1434 = vstv %s1433
      %v1435 = vmul.f32 %v72, %v1434
      %v1436 = vmul.f32 %v73, %v1434
      %v1437 = vmul.f32 %v74, %v1434
      %v1438 = vmul.f32 %v75, %v1434
      %v1443 = vrot.slane %v1435, 2
      %v1444 = vrot.slane %v1436, 2
      %v1445 = vsel %vm132, %v1443, %v1444
      %v1446 = vrot.slane %v1437, 2
      %v1447 = vsel %vm132, %v1444, %v1446
      %v1448 = vrot.slane %v1438, 2
      %v1449 = vsel %vm132, %v1446, %v1448
      %v1454 = vadd.f32 %v1429, %v1445
      %v1455 = vadd.f32 %v1430, %v1447
      %v1456 = vadd.f32 %v1431, %v1449
      %v1457 = vadd.f32 %v1432, %v1448
      %s1458 = sld [smem:[#allocation3 + $0x42]]
      %v1459 = vstv %s1458
      %v1460 = vmul.f32 %v79, %v1459
      %v1461 = vmul.f32 %v80, %v1459
      %v1462 = vmul.f32 %v81, %v1459
      %v1463 = vmul.f32 %v82, %v1459
      %v1464 = vadd.f32 %v1454, %v1460
      %v1465 = vadd.f32 %v1455, %v1461
      %v1466 = vadd.f32 %v1456, %v1462
      %v1467 = vadd.f32 %v1457, %v1463
      %s1468 = sld [smem:[#allocation3 + $0x43]]
      %v1469 = vstv %s1468
      %v1470 = vmul.f32 %v79, %v1469
      %v1471 = vmul.f32 %v80, %v1469
      %v1472 = vmul.f32 %v81, %v1469
      %v1473 = vmul.f32 %v82, %v1469
      %v1478 = vrot.slane %v1470, 1
      %v1479 = vrot.slane %v1471, 1
      %v1480 = vsel %vm106, %v1478, %v1479
      %v1481 = vrot.slane %v1472, 1
      %v1482 = vsel %vm106, %v1479, %v1481
      %v1483 = vrot.slane %v1473, 1
      %v1484 = vsel %vm106, %v1481, %v1483
      %v1489 = vadd.f32 %v1464, %v1480
      %v1490 = vadd.f32 %v1465, %v1482
      %v1491 = vadd.f32 %v1466, %v1484
      %v1492 = vadd.f32 %v1467, %v1483
      %s1493 = sld [smem:[#allocation3 + $0x44]]
      %v1494 = vstv %s1493
      %v1495 = vmul.f32 %v79, %v1494
      %v1496 = vmul.f32 %v80, %v1494
      %v1497 = vmul.f32 %v81, %v1494
      %v1498 = vmul.f32 %v82, %v1494
      %v1503 = vrot.slane %v1495, 2
      %v1504 = vrot.slane %v1496, 2
      %v1505 = vsel %vm132, %v1503, %v1504
      %v1506 = vrot.slane %v1497, 2
      %v1507 = vsel %vm132, %v1504, %v1506
      %v1508 = vrot.slane %v1498, 2
      %v1509 = vsel %vm132, %v1506, %v1508
      %v1514 = vadd.f32 %v1489, %v1505
      %v1515 = vadd.f32 %v1490, %v1507
      %v1516 = vadd.f32 %v1491, %v1509
      %v1517 = vadd.f32 %v1492, %v1508
      %s1518 = sld [smem:[#allocation3 + $0x45]]
      %v1519 = vstv %s1518
      %v1520 = vmul.f32 %v86, %v1519
      %v1521 = vmul.f32 %v87, %v1519
      %v1522 = vmul.f32 %v88, %v1519
      %v1523 = vmul.f32 %v89, %v1519
      %v1524 = vadd.f32 %v1514, %v1520
      %v1525 = vadd.f32 %v1515, %v1521
      %v1526 = vadd.f32 %v1516, %v1522
      %v1527 = vadd.f32 %v1517, %v1523
      %s1528 = sld [smem:[#allocation3 + $0x46]]
      %v1529 = vstv %s1528
      %v1530 = vmul.f32 %v86, %v1529
      %v1531 = vmul.f32 %v87, %v1529
      %v1532 = vmul.f32 %v88, %v1529
      %v1533 = vmul.f32 %v89, %v1529
      %v1538 = vrot.slane %v1530, 1
      %v1539 = vrot.slane %v1531, 1
      %v1540 = vsel %vm106, %v1538, %v1539
      %v1541 = vrot.slane %v1532, 1
      %v1542 = vsel %vm106, %v1539, %v1541
      %v1543 = vrot.slane %v1533, 1
      %v1544 = vsel %vm106, %v1541, %v1543
      %v1549 = vadd.f32 %v1524, %v1540
      %v1550 = vadd.f32 %v1525, %v1542
      %v1551 = vadd.f32 %v1526, %v1544
      %v1552 = vadd.f32 %v1527, %v1543
      %s1553 = sld [smem:[#allocation3 + $0x47]]
      %v1554 = vstv %s1553
      %v1555 = vmul.f32 %v86, %v1554
      %v1556 = vmul.f32 %v87, %v1554
      %v1557 = vmul.f32 %v88, %v1554
      %v1558 = vmul.f32 %v89, %v1554
      %v1563 = vrot.slane %v1555, 2
      %v1564 = vrot.slane %v1556, 2
      %v1565 = vsel %vm132, %v1563, %v1564
      %v1566 = vrot.slane %v1557, 2
      %v1567 = vsel %vm132, %v1564, %v1566
      %v1568 = vrot.slane %v1558, 2
      %v1569 = vsel %vm132, %v1566, %v1568
      %v1574 = vadd.f32 %v1549, %v1565
      %v1575 = vadd.f32 %v1550, %v1567
      %v1576 = vadd.f32 %v1551, %v1569
      %v1577 = vadd.f32 %v1552, %v1568
      %v1578 = vsel %vm268, %v1577, -inf
      %v1579 = vmax.f32 %v1574, %v1575
      %v1580 = vmax.f32 %v1576, %v1578
      %v1581 = vmax.f32 %v1579, %v1580
      %v1582 = vrot.slane %v1581, 4
      %v1583 = vmax.f32 %v1581, %v1582
      %v1584 = vrot.slane %v1583, 2
      %v1585 = vmax.f32 %v1583, %v1584
      %v1586 = vrot.slane %v1585, 1
      %v1587 = vmax.f32 %v1585, %v1586
      %v1588 = vmax.f32 %v69, %v1587
    $region42: #{tpu_custom_call.1} parent=1 // loop_footer
      %s61 = sadd.s32 1, %s57
    $region43: #{tpu_custom_call.1} parent=1 // loop_footer_branch
      %56 = sbr.rel target = $region39
    $region44: #{tpu_custom_call.1} parent=1 // loop_exit
      _
    %1589 = vst [vmem:[#allocation2] sm:$0x1] %v62
    %1590 = vst [vmem:[#allocation2 + $0x1] sm:$0x1] %v63
    %1591 = vst [vmem:[#allocation2 + $0x2] sm:$0x1] %v64
    %1592 = vst [vmem:[#allocation2 + $0x3] sm:$0x1] %v65
    %1593 = vst [vmem:[#allocation2 + $0x4] sm:$0x1] %v66
    %1594 = vst [vmem:[#allocation2 + $0x5] sm:$0x1] %v67
    %1595 = vst [vmem:[#allocation2 + $0x6] sm:$0x1] %v68
    %1596 = vst [vmem:[#allocation2 + $0x7] sm:$0x1] %v69
    %v1597 = vld [vmem:[#allocation2] sm:$0xff]
    %v1598 = vld [vmem:[%s2] sm:$0xff]
    %1600 = vset.pattern.permute.xlu0 0
    %1601 = vperm.xlu0 %1600, %v1598
    %v1602 = vpop.permute.xlu0 %1601
    %v1604 = vadd.f32 %v1597, %v1602
    %v1605 = vmax.f32 %v1604, 0.0
    %v1606 = vld [vmem:[%s3] sm:$0xff]
    %v1607 = vld [vmem:[%s4] sm:$0xff]
    %1609 = vset.pattern.permute.xlu0 0
    %1610 = vperm.xlu0 %1609, %v1607
    %v1611 = vpop.permute.xlu0 %1610
    %vm1613 = vcmask 64512
    %v1615 = vsel %vm1613, %v1606, 0
    %1617 = vmatpush.msra.mxu0 0.0
    %1618 = vmatpush.msra.mxu0 0.0
    %1619 = vmatpush.msra.mxu0 0.0
    %1620 = vmatpush.msra.mxu0 0.0
    %1621 = vmatpush.msra.mxu0 0.0
    %1622 = vmatpush.msra.mxu0 0.0
    %1623 = vmatpush.msra.mxu0 0.0
    %1624 = vmatpush.msra.mxu0 0.0
    %1625 = vmatpush.msra.mxu0 0.0
    %1626 = vmatpush.msra.mxu0 0.0
    %1627 = vmatpush.msra.mxu0 0.0
    %1628 = vmatpush.msra.mxu0 0.0
    %1629 = vmatpush.msra.mxu0 0.0
    %1630 = vmatpush.msra.mxu0 0.0
    %1631 = vmatpush.msra.mxu0 0.0
    %1632 = vmatpush.msra.mxu0 %v1605
    %1633 = vmatmul.f32.gmra.mxu0 %v1615
    %v1634 = vpop.f32.mrf.mxu0
    %v1635 = vadd.f32 %v1611, %v1634
    %1636 = vdwg.mxu0
    %v1637 = vmax.f32 %v1635, 0.0
    %v1638 = vld [vmem:[%s5] sm:$0x3]
    %v1639 = vld [vmem:[%s6] sm:$0x3]
    %1641 = vset.pattern.permute.xlu0 0
    %1642 = vperm.xlu0 %1641, %v1639
    %v1643 = vpop.permute.xlu0 %1642
    %v1646 = vsel %vm1613, %v1638, 0
    %1648 = vmatpush.msra.mxu0 0.0
    %1649 = vmatpush.msra.mxu0 0.0
    %1650 = vmatpush.msra.mxu0 0.0
    %1651 = vmatpush.msra.mxu0 0.0
    %1652 = vmatpush.msra.mxu0 0.0
    %1653 = vmatpush.msra.mxu0 0.0
    %1654 = vmatpush.msra.mxu0 0.0
    %1655 = vmatpush.msra.mxu0 0.0
    %1656 = vmatpush.msra.mxu0 0.0
    %1657 = vmatpush.msra.mxu0 0.0
    %1658 = vmatpush.msra.mxu0 0.0
    %1659 = vmatpush.msra.mxu0 0.0
    %1660 = vmatpush.msra.mxu0 0.0
    %1661 = vmatpush.msra.mxu0 0.0
    %1662 = vmatpush.msra.mxu0 0.0
    %1663 = vmatpush.msra.mxu0 %v1637
    %1664 = vmatmul.f32.gmra.mxu0 %v1646
    %v1665 = vpop.f32.mrf.mxu0
    %v1666 = vadd.f32 %v1643, %v1665
    %1667 = vdwg.mxu0
    %vm1668 = vcmask 1041408
    %v1669 = vsel %vm1668, %v1666, -inf
    %v1670 = vrot.slane %v1669, 4
    %v1671 = vmax.f32 %v1669, %v1670
    %v1672 = vrot.slane %v1671, 2
    %v1673 = vmax.f32 %v1671, %v1672
    %v1674 = vrot.slane %v1673, 1
    %v1675 = vmax.f32 %v1673, %v1674
    %v1676 = vsub.f32 %v1666, %v1675
    %v1677 = vmul.f32 %v1676, 1.442695
    %v1678 = vpow.pop %v1677
    %v1679 = vsel %vm1668, %v1678, 0.0
    %v1680 = vrot.slane %v1679, 4
    %v1681 = vadd.f32 %v1679, %v1680
    %v1682 = vrot.slane %v1681, 2
    %v1683 = vadd.f32 %v1681, %v1682
    %v1684 = vrot.slane %v1683, 1
    %v1685 = vadd.f32 %v1683, %v1684
    %v1686 = vlog2.pop %v1685
    %v1687 = vmul.f32 %v1686, 0.6931472
    %v1688 = vsub.f32 %v1676, %v1687
    %1689 = vst [vmem:[#allocation8] sm:$0x3] %v1688
    // Predicated region
    $region45: #{tpu_custom_call.1} parent=1 // pred_check
      _
    $region46: #{tpu_custom_call.1} parent=1 // pred_check_branch
      %1691 = sbr.rel (0) target = $region48
    $region47: #{tpu_custom_call.1} parent=1 // pred_region
      %1693 = vsyncadd [#allocation5], 0
      %s1695 = sshll.u32 [#allocation8], 4
      %s1696 = int_to_ptr.vmem [resolvable:$true] %s1695
      %s1697 = sshll.u32 %s7, 4
      %s1698 = int_to_ptr.hbm [resolvable:$true] %s1697
      %1700 = dma.vmem_to_hbm [thread:$0]  %s1696, 32, %s1698, [#allocation5]
    $region48: #{tpu_custom_call.1} parent=1 // pred_fallthru
      _
    // Predicated region
    $region49: #{tpu_custom_call.1} parent=1 // pred_check
      _
    $region50: #{tpu_custom_call.1} parent=1 // pred_check_branch
      %1702 = sbr.rel (0) target = $region52
    $region51: #{tpu_custom_call.1} parent=1 // pred_region
      %1704 = dma.done [#allocation5], 32
    $region52: #{tpu_custom_call.1} parent=1 // pred_fallthru
      _
    %1705 = vsyncpa [#allocation4], 1
    %1706 = vsyncpa [#allocation5], 1
    %1707 = vsyncpa [#allocation6], 1

</llo_original>
